<compile_context>
chip_gen: v5e
topology: v5e:2x2
jax: 0.10.0
libtpu: 0.0.40
codegen_flags: <defaults>
</compile_context>

<pallas_src>
import jax
import jax.numpy as jnp
from jax.experimental import pallas as pl
from jax.experimental.pallas import tpu as pltpu


def _round_up(x, m):
    return ((x + m - 1) // m) * m


def _mlp_edge_kernel(hs_ref, hd_ref, w1s_ref, w1d_ref, b1_ref, w2_ref, b2_ref,
                     o_ref):
    # hs_ref, hd_ref : (tile_e, h_feats)     edge src/dst features (bf16 or f32)
    # w1s_ref/w1d_ref: (h_feats, h_feats)    src/dst halves of W1 (same dtype)
    # b1_ref         : (1, h_feats) f32
    # w2_ref         : (1, h_feats) f32      W2 as a row vector
    # b2_ref         : (1, 1)       f32
    # o_ref          : (tile_e//128, 128) f32  lane-dense scores
    sub, lanes = o_ref.shape
    h_feats = b1_ref.shape[-1]

    # x @ W1 == h_src @ W1_src + h_dst @ W1_dst    (MXU, f32 accumulation)
    h1 = jnp.dot(hs_ref[...], w1s_ref[...], preferred_element_type=jnp.float32)
    h1 = h1 + jnp.dot(hd_ref[...], w1d_ref[...],
                      preferred_element_type=jnp.float32)
    h1 = jnp.maximum(h1 + b1_ref[...], 0.0)          # ReLU, (tile_e, h_feats)

    # Second layer (output width 1): VPU multiply + lane reduce instead of an
    # N=1 MXU matmul; fold the per-edge scores into a lane-dense block.
    p = h1 * w2_ref[...]                             # (tile_e, h_feats)
    p = p.reshape(sub, lanes, h_feats)               # major-dim split (cheap)
    s = jnp.sum(p, axis=-1) + b2_ref[...]            # (tile_e//128, 128)
    o_ref[...] = s.astype(o_ref.dtype)


def mlp_predictor_scores(h, src, dst, params, *, tile_e=2048, use_bf16=True):
    """Per-edge MLP scores.

    h:   [N, h_feats] float32 node features
    src: [E] int32 source node indices
    dst: [E] int32 destination node indices
    params: dict with w1 [2h, h], b1 [h], w2 [h, 1], b2 [1]  (W stored [in, out])
    returns: [E] float32 scores
    """
    h_feats = h.shape[1]
    E = src.shape[0]

    # Edge tile: multiple of 1024 so the lane-dense output block is
    # (tile_e//128 >= 8, 128); shrink for small edge counts to limit padding.
    tile_e = _round_up(min(max(tile_e, 1024), _round_up(E, 1024)), 1024)
    E_pad = _round_up(E, tile_e)

    # Pad the edge list with a valid node index (0) so the gather stays
    # in-bounds; padded scores are sliced off at the end.
    if E_pad != E:
        pad = jnp.zeros((E_pad - E,), dtype=src.dtype)
        src = jnp.concatenate([src, pad])
        dst = jnp.concatenate([dst, pad])

    in_dtype = jnp.bfloat16 if use_bf16 else jnp.float32
    h_c = h.astype(in_dtype)
    h_src = h_c[src]                                  # (E_pad, h_feats)
    h_dst = h_c[dst]                                  # (E_pad, h_feats)

    w1 = params["w1"]                                 # (2*h_feats, h_feats)
    w1_src = w1[:h_feats].astype(in_dtype)            # (h_feats, h_feats)
    w1_dst = w1[h_feats:].astype(in_dtype)            # (h_feats, h_feats)
    b1 = params["b1"].reshape(1, h_feats).astype(jnp.float32)
    w2_row = params["w2"].reshape(1, h_feats).astype(jnp.float32)
    b2 = params["b2"].reshape(1, 1).astype(jnp.float32)

    grid = (E_pad // tile_e,)
    sub = tile_e // 128

    out = pl.pallas_call(
        _mlp_edge_kernel,
        out_shape=jax.ShapeDtypeStruct((E_pad // 128, 128), jnp.float32),
        grid_spec=pltpu.PrefetchScalarGridSpec(
            num_scalar_prefetch=0,
            grid=grid,
            in_specs=[
                pl.BlockSpec((tile_e, h_feats), lambda i: (i, 0)),   # h_src
                pl.BlockSpec((tile_e, h_feats), lambda i: (i, 0)),   # h_dst
                pl.BlockSpec((h_feats, h_feats), lambda i: (0, 0)),  # W1 src half
                pl.BlockSpec((h_feats, h_feats), lambda i: (0, 0)),  # W1 dst half
                pl.BlockSpec((1, h_feats), lambda i: (0, 0)),        # b1
                pl.BlockSpec((1, h_feats), lambda i: (0, 0)),        # W2 row
                pl.BlockSpec((1, 1), lambda i: (0, 0)),              # b2
            ],
            out_specs=pl.BlockSpec((sub, 128), lambda i: (i, 0)),
        ),
        compiler_params=pltpu.CompilerParams(
            dimension_semantics=("parallel",),
        ),
    )(h_src, h_dst, w1_src, w1_dst, b1, w2_row, b2)

    # Lane-dense (E_pad//128, 128) -> flat [E]; row-major flatten recovers the
    # original edge order exactly (edge e = i*tile_e + t -> (i*sub + t//128, t%128)).
    return out.reshape(-1)[:E]


def init_params(key, h_feats):
    """Deterministic init matching nn.Linear shapes (stored as [in, out])."""
    k1, k2, k3, k4 = jax.random.split(key, 4)
    in1 = 2 * h_feats
    bound1 = 1.0 / jnp.sqrt(in1)
    bound2 = 1.0 / jnp.sqrt(h_feats)
    return {
        "w1": jax.random.uniform(k1, (in1, h_feats), jnp.float32, -bound1, bound1),
        "b1": jax.random.uniform(k2, (h_feats,), jnp.float32, -bound1, bound1),
        "w2": jax.random.uniform(k3, (h_feats, 1), jnp.float32, -bound2, bound2),
        "b2": jax.random.uniform(k4, (1,), jnp.float32, -bound2, bound2),
    }


if __name__ == "__main__":
    h_feats = 32     # hidden feature size
    n_nodes = 16
    n_edges = 64

    key = jax.random.PRNGKey(0)
    k_h, k_src, k_dst, k_param = jax.random.split(key, 4)

    h = jax.random.normal(k_h, (n_nodes, h_feats), dtype=jnp.float32)
    src = jax.random.randint(k_src, (n_edges,), 0, n_nodes, dtype=jnp.int32)
    dst = jax.random.randint(k_dst, (n_edges,), 0, n_nodes, dtype=jnp.int32)
    params = init_params(k_param, h_feats)

    scores = mlp_predictor_scores(h, src, dst, params)
    jax.block_until_ready(scores)
    assert scores.shape == (n_edges,)

    # Pure-JAX reference with the same bf16 cast of the streamed operands
    # (f32 accumulation), matching the kernel's numerics.
    h_b = h.astype(jnp.bfloat16).astype(jnp.float32)
    w1_b = params["w1"].astype(jnp.bfloat16).astype(jnp.float32)
    x_ref = jnp.concatenate([h_b[src], h_b[dst]], axis=1)
    h1_ref = jnp.maximum(
        jnp.dot(x_ref, w1_b, preferred_element_type=jnp.float32) + params["b1"],
        0.0)
    ref = (jnp.dot(h1_ref, params["w2"], preferred_element_type=jnp.float32)
           + params["b2"])[:, 0]
    assert jnp.allclose(scores, ref, atol=1e-3, rtol=1e-3), (
        float(jnp.max(jnp.abs(scores - ref))))

    print("KERNEL_OK")
</pallas_src>

<mosaic_0001>
module attributes {stable_mosaic.version = 11 : i64} {
  func.func @_mlp_edge_kernel(%arg0: i32, %arg1: memref<1024x32xbf16, #tpu.memory_space<vmem>>, %arg2: memref<1024x32xbf16, #tpu.memory_space<vmem>>, %arg3: memref<32x32xbf16, #tpu.memory_space<vmem>>, %arg4: memref<32x32xbf16, #tpu.memory_space<vmem>>, %arg5: memref<1x32xf32, #tpu.memory_space<vmem>>, %arg6: memref<1x32xf32, #tpu.memory_space<vmem>>, %arg7: memref<1x1xf32, #tpu.memory_space<vmem>>, %arg8: memref<8x128xf32, #tpu.memory_space<vmem>>) attributes {dimension_semantics = [#tpu.dimension_semantics<parallel>], iteration_bounds = array<i64: 1>, scalar_prefetch = 0 : i64, scratch_operands = 0 : i64, tpu.core_type = #tpu.core_type<tc>, window_params = [{transform_indices = @transform_0, window_bounds = array<i64: 1024, 32>}, {transform_indices = @transform_1, window_bounds = array<i64: 1024, 32>}, {pipeline_mode = #tpu.pipeline_mode<synchronous>, transform_indices = @transform_2, window_bounds = array<i64: 32, 32>}, {pipeline_mode = #tpu.pipeline_mode<synchronous>, transform_indices = @transform_3, window_bounds = array<i64: 32, 32>}, {pipeline_mode = #tpu.pipeline_mode<synchronous>, transform_indices = @transform_4, window_bounds = array<i64: 1, 32>}, {pipeline_mode = #tpu.pipeline_mode<synchronous>, transform_indices = @transform_5, window_bounds = array<i64: 1, 32>}, {pipeline_mode = #tpu.pipeline_mode<synchronous>, transform_indices = @transform_6, window_bounds = array<i64: 1, 1>}, {transform_indices = @transform_7, window_bounds = array<i64: 8, 128>}]} {
    %c0 = arith.constant 0 : index
    %c0_0 = arith.constant 0 : index
    %0 = vector.load %arg1[%c0, %c0_0] : memref<1024x32xbf16, #tpu.memory_space<vmem>>, vector<1024x32xbf16>
    %c0_1 = arith.constant 0 : index
    %c0_2 = arith.constant 0 : index
    %1 = vector.load %arg3[%c0_1, %c0_2] : memref<32x32xbf16, #tpu.memory_space<vmem>>, vector<32x32xbf16>
    %cst = arith.constant dense<0.000000e+00> : vector<1024x32xf32>
    %2 = tpu.matmul %0, %1, %cst {dimension_numbers = #tpu.dot_dimension_numbers<[1], [0], [0], [1], [0, 0, 1, 1], [], []>} : vector<1024x32xbf16>, vector<32x32xbf16>, vector<1024x32xf32> -> vector<1024x32xf32>
    %c0_3 = arith.constant 0 : index
    %c0_4 = arith.constant 0 : index
    %3 = vector.load %arg2[%c0_3, %c0_4] : memref<1024x32xbf16, #tpu.memory_space<vmem>>, vector<1024x32xbf16>
    %c0_5 = arith.constant 0 : index
    %c0_6 = arith.constant 0 : index
    %4 = vector.load %arg4[%c0_5, %c0_6] : memref<32x32xbf16, #tpu.memory_space<vmem>>, vector<32x32xbf16>
    %cst_7 = arith.constant dense<0.000000e+00> : vector<1024x32xf32>
    %5 = tpu.matmul %3, %4, %cst_7 {dimension_numbers = #tpu.dot_dimension_numbers<[1], [0], [0], [1], [0, 0, 1, 1], [], []>} : vector<1024x32xbf16>, vector<32x32xbf16>, vector<1024x32xf32> -> vector<1024x32xf32>
    %6 = arith.addf %2, %5 : vector<1024x32xf32>
    %c0_8 = arith.constant 0 : index
    %c0_9 = arith.constant 0 : index
    %7 = vector.load %arg5[%c0_8, %c0_9] : memref<1x32xf32, #tpu.memory_space<vmem>>, vector<1x32xf32>
    %8 = vector.broadcast %7 : vector<1x32xf32> to vector<1024x32xf32>
    %9 = arith.addf %6, %8 : vector<1024x32xf32>
    %cst_10 = arith.constant 0.000000e+00 : f32
    %10 = vector.broadcast %cst_10 : f32 to vector<1024x32xf32>
    %11 = arith.maximumf %9, %10 : vector<1024x32xf32>
    %c0_11 = arith.constant 0 : index
    %c0_12 = arith.constant 0 : index
    %12 = vector.load %arg6[%c0_11, %c0_12] : memref<1x32xf32, #tpu.memory_space<vmem>>, vector<1x32xf32>
    %13 = vector.broadcast %12 : vector<1x32xf32> to vector<1024x32xf32>
    %14 = arith.mulf %11, %13 : vector<1024x32xf32>
    %15 = vector.shape_cast %14 : vector<1024x32xf32> to vector<8x128x32xf32>
    %cst_13 = arith.constant dense<0.000000e+00> : vector<8x128xf32>
    %16 = vector.multi_reduction <add>, %15, %cst_13 [2] : vector<8x128x32xf32> to vector<8x128xf32>
    %c0_14 = arith.constant 0 : index
    %c0_15 = arith.constant 0 : index
    %17 = vector.load %arg7[%c0_14, %c0_15] : memref<1x1xf32, #tpu.memory_space<vmem>>, vector<1x1xf32>
    %18 = vector.broadcast %17 : vector<1x1xf32> to vector<8x128xf32>
    %19 = arith.addf %16, %18 : vector<8x128xf32>
    %c0_16 = arith.constant 0 : index
    %c0_17 = arith.constant 0 : index
    %20 = vector.load %arg8[%c0_16, %c0_17] : memref<8x128xf32, #tpu.memory_space<vmem>>, vector<8x128xf32>
    tpu.vector_store %arg8[%c0_16, %c0_17], %19 {strides = array<i32>} : memref<8x128xf32, #tpu.memory_space<vmem>>, vector<8x128xf32>,
    return
  }
  func.func @transform_0(%arg0: i32) -> (i32, i32) {
    %c0_i32 = arith.constant 0 : i32
    %c0_i32_0 = arith.constant 0 : i32
    return %arg0, %c0_i32 : i32, i32
  }
  func.func @transform_1(%arg0: i32) -> (i32, i32) {
    %c0_i32 = arith.constant 0 : i32
    %c0_i32_0 = arith.constant 0 : i32
    return %arg0, %c0_i32 : i32, i32
  }
  func.func @transform_2(%arg0: i32) -> (i32, i32) {
    %c0_i32 = arith.constant 0 : i32
    %c0_i32_0 = arith.constant 0 : i32
    %c0_i32_1 = arith.constant 0 : i32
    return %c0_i32, %c0_i32_0 : i32, i32
  }
  func.func @transform_3(%arg0: i32) -> (i32, i32) {
    %c0_i32 = arith.constant 0 : i32
    %c0_i32_0 = arith.constant 0 : i32
    %c0_i32_1 = arith.constant 0 : i32
    return %c0_i32, %c0_i32_0 : i32, i32
  }
  func.func @transform_4(%arg0: i32) -> (i32, i32) {
    %c0_i32 = arith.constant 0 : i32
    %c0_i32_0 = arith.constant 0 : i32
    %c0_i32_1 = arith.constant 0 : i32
    return %c0_i32, %c0_i32_0 : i32, i32
  }
  func.func @transform_5(%arg0: i32) -> (i32, i32) {
    %c0_i32 = arith.constant 0 : i32
    %c0_i32_0 = arith.constant 0 : i32
    %c0_i32_1 = arith.constant 0 : i32
    return %c0_i32, %c0_i32_0 : i32, i32
  }
  func.func @transform_6(%arg0: i32) -> (i32, i32) {
    %c0_i32 = arith.constant 0 : i32
    %c0_i32_0 = arith.constant 0 : i32
    %c0_i32_1 = arith.constant 0 : i32
    return %c0_i32, %c0_i32_0 : i32, i32
  }
  func.func @transform_7(%arg0: i32) -> (i32, i32) {
    %c0_i32 = arith.constant 0 : i32
    %c0_i32_0 = arith.constant 0 : i32
    return %arg0, %c0_i32 : i32, i32
  }
}

</mosaic_0001>

<llo_original>
// kernel: tpu_custom_call.1
$region0: #{tpu_custom_call.1}
  #allocation0 [shape = 'u32[]', space=smem, size = 0x4, offset = 0x4, fixed_abs, tag = 'smem constant byte address 0x4 - core index']
  #allocation1 [shape = 'u32[72,128]{1,0:T(1,128)}', space=vmem, size = 0x9000, scoped, tag = 'internal scratch']
  #allocation2 [shape = 'f32[1,1]{1,0:T(1,128)S(1)}', space=vmem, size = 0x200, scoped, tag = 'scoped memory for tpu_custom_call.1']
  %s0 = inlined_call_operand.vmem [shape: bf16[1024,32], index: 0, kind: input, shape index: {}]
  %s1 = inlined_call_operand.vmem [shape: bf16[1024,32], index: 1, kind: input, shape index: {}]
  %s2 = inlined_call_operand.vmem [shape: bf16[32,32], index: 2, kind: input, shape index: {}]
  %s3 = inlined_call_operand.vmem [shape: bf16[32,32], index: 3, kind: input, shape index: {}]
  %s4 = inlined_call_operand.vmem [shape: f32[1,32], index: 4, kind: input, shape index: {}]
  %s5 = inlined_call_operand.vmem [shape: f32[1,32], index: 5, kind: input, shape index: {}]
  %s6 = inlined_call_operand.<no memory space> [shape: f32[1,1], index: 6, kind: input, shape index: {}]
  %s7 = inlined_call_operand.hbm [shape: f32[8,128], index: 7, kind: output, shape index: {}]
  %s8 = sld [smem:[#allocation0]]
  $region38: #{tpu_custom_call.1} parent=0
    _
  %s10 = ssub.s32 1, %s8
  %s11 = scalar_select 0, %s10, %s8
  %v12 = vstv %s6
  %13 = vst [vmem:[#allocation2] sm:$0x1] %v12
  $region1: #{tpu_custom_call.1} parent=0
    #allocation3 [shape = 'u8[4096]{0}', space=vmem, size = 0x1000, scoped, tag = 'output window, operand 0, single buffered']
    #allocation4 [shape = 's32[1]{0}', space=sflag, size = 0x4, scoped, tag = 'scoped memory for tpu_custom_call.1']
    %14 = vsyncpa [#allocation4], 0
    // Predicated region
    $region2: #{tpu_custom_call.1} parent=1 // pred_check
      _
    $region3: #{tpu_custom_call.1} parent=1 // pred_check_branch
      %16 = sbr.rel (0) target = $region5
    $region4: #{tpu_custom_call.1} parent=1 // pred_region
      _
    $region5: #{tpu_custom_call.1} parent=1 // pred_fallthru
      _
    // Predicated region
    $region6: #{tpu_custom_call.1} parent=1 // pred_check
      _
    $region7: #{tpu_custom_call.1} parent=1 // pred_check_branch
      %18 = sbr.rel (0) target = $region9
    $region8: #{tpu_custom_call.1} parent=1 // pred_region
      _
    $region9: #{tpu_custom_call.1} parent=1 // pred_fallthru
      _
    // Predicated region
    $region10: #{tpu_custom_call.1} parent=1 // pred_check
      _
    $region11: #{tpu_custom_call.1} parent=1 // pred_check_branch
      %20 = sbr.rel (0) target = $region13
    $region12: #{tpu_custom_call.1} parent=1 // pred_region
      _
    $region13: #{tpu_custom_call.1} parent=1 // pred_fallthru
      _
    // Predicated region
    $region14: #{tpu_custom_call.1} parent=1 // pred_check
      _
    $region15: #{tpu_custom_call.1} parent=1 // pred_check_branch
      %22 = sbr.rel (0) target = $region17
    $region16: #{tpu_custom_call.1} parent=1 // pred_region
      _
    $region17: #{tpu_custom_call.1} parent=1 // pred_fallthru
      _
    // Predicated region
    $region18: #{tpu_custom_call.1} parent=1 // pred_check
      _
    $region19: #{tpu_custom_call.1} parent=1 // pred_check_branch
      %24 = sbr.rel (0) target = $region21
    $region20: #{tpu_custom_call.1} parent=1 // pred_region
      _
    $region21: #{tpu_custom_call.1} parent=1 // pred_fallthru
      _
    // Predicated region
    $region22: #{tpu_custom_call.1} parent=1 // pred_check
      _
    $region23: #{tpu_custom_call.1} parent=1 // pred_check_branch
      %26 = sbr.rel (0) target = $region25
    $region24: #{tpu_custom_call.1} parent=1 // pred_region
      _
    $region25: #{tpu_custom_call.1} parent=1 // pred_fallthru
      _
    // Predicated region
    $region26: #{tpu_custom_call.1} parent=1 // pred_check
      _
    $region27: #{tpu_custom_call.1} parent=1 // pred_check_branch
      %28 = sbr.rel (0) target = $region29
    $region28: #{tpu_custom_call.1} parent=1 // pred_region
      _
    $region29: #{tpu_custom_call.1} parent=1 // pred_fallthru
      _
    %v30 = vld [vmem:[%s0] sm:$0xf]
    %v31 = vld [vmem:[%s0 + $0x4] sm:$0xf]
    %v32 = vld [vmem:[%s0 + $0x8] sm:$0xf]
    %v33 = vld [vmem:[%s0 + $0xc] sm:$0xf]
    %v34 = vld [vmem:[%s0 + $0x10] sm:$0xf]
    %v35 = vld [vmem:[%s0 + $0x14] sm:$0xf]
    %v36 = vld [vmem:[%s0 + $0x18] sm:$0xf]
    %v37 = vld [vmem:[%s0 + $0x1c] sm:$0xf]
    %v38 = vld [vmem:[%s0 + $0x20] sm:$0xf]
    %v39 = vld [vmem:[%s0 + $0x24] sm:$0xf]
    %v40 = vld [vmem:[%s0 + $0x28] sm:$0xf]
    %v41 = vld [vmem:[%s0 + $0x2c] sm:$0xf]
    %v42 = vld [vmem:[%s0 + $0x30] sm:$0xf]
    %v43 = vld [vmem:[%s0 + $0x34] sm:$0xf]
    %v44 = vld [vmem:[%s0 + $0x38] sm:$0xf]
    %v45 = vld [vmem:[%s0 + $0x3c] sm:$0xf]
    %v46 = vld [vmem:[%s0 + $0x40] sm:$0xf]
    %v47 = vld [vmem:[%s0 + $0x44] sm:$0xf]
    %v48 = vld [vmem:[%s0 + $0x48] sm:$0xf]
    %v49 = vld [vmem:[%s0 + $0x4c] sm:$0xf]
    %v50 = vld [vmem:[%s0 + $0x50] sm:$0xf]
    %v51 = vld [vmem:[%s0 + $0x54] sm:$0xf]
    %v52 = vld [vmem:[%s0 + $0x58] sm:$0xf]
    %v53 = vld [vmem:[%s0 + $0x5c] sm:$0xf]
    %v54 = vld [vmem:[%s0 + $0x60] sm:$0xf]
    %v55 = vld [vmem:[%s0 + $0x64] sm:$0xf]
    %v56 = vld [vmem:[%s0 + $0x68] sm:$0xf]
    %v57 = vld [vmem:[%s0 + $0x6c] sm:$0xf]
    %v58 = vld [vmem:[%s0 + $0x70] sm:$0xf]
    %v59 = vld [vmem:[%s0 + $0x74] sm:$0xf]
    %v60 = vld [vmem:[%s0 + $0x78] sm:$0xf]
    %v61 = vld [vmem:[%s0 + $0x7c] sm:$0xf]
    %v62 = vld [vmem:[%s0 + $0x80] sm:$0xf]
    %v63 = vld [vmem:[%s0 + $0x84] sm:$0xf]
    %v64 = vld [vmem:[%s0 + $0x88] sm:$0xf]
    %v65 = vld [vmem:[%s0 + $0x8c] sm:$0xf]
    %v66 = vld [vmem:[%s0 + $0x90] sm:$0xf]
    %v67 = vld [vmem:[%s0 + $0x94] sm:$0xf]
    %v68 = vld [vmem:[%s0 + $0x98] sm:$0xf]
    %v69 = vld [vmem:[%s0 + $0x9c] sm:$0xf]
    %v70 = vld [vmem:[%s0 + $0xa0] sm:$0xf]
    %v71 = vld [vmem:[%s0 + $0xa4] sm:$0xf]
    %v72 = vld [vmem:[%s0 + $0xa8] sm:$0xf]
    %v73 = vld [vmem:[%s0 + $0xac] sm:$0xf]
    %v74 = vld [vmem:[%s0 + $0xb0] sm:$0xf]
    %v75 = vld [vmem:[%s0 + $0xb4] sm:$0xf]
    %v76 = vld [vmem:[%s0 + $0xb8] sm:$0xf]
    %v77 = vld [vmem:[%s0 + $0xbc] sm:$0xf]
    %v78 = vld [vmem:[%s0 + $0xc0] sm:$0xf]
    %v79 = vld [vmem:[%s0 + $0xc4] sm:$0xf]
    %v80 = vld [vmem:[%s0 + $0xc8] sm:$0xf]
    %v81 = vld [vmem:[%s0 + $0xcc] sm:$0xf]
    %v82 = vld [vmem:[%s0 + $0xd0] sm:$0xf]
    %v83 = vld [vmem:[%s0 + $0xd4] sm:$0xf]
    %v84 = vld [vmem:[%s0 + $0xd8] sm:$0xf]
    %v85 = vld [vmem:[%s0 + $0xdc] sm:$0xf]
    %v86 = vld [vmem:[%s0 + $0xe0] sm:$0xf]
    %v87 = vld [vmem:[%s0 + $0xe4] sm:$0xf]
    %v88 = vld [vmem:[%s0 + $0xe8] sm:$0xf]
    %v89 = vld [vmem:[%s0 + $0xec] sm:$0xf]
    %v90 = vld [vmem:[%s0 + $0xf0] sm:$0xf]
    %v91 = vld [vmem:[%s0 + $0xf4] sm:$0xf]
    %v92 = vld [vmem:[%s0 + $0xf8] sm:$0xf]
    %v93 = vld [vmem:[%s0 + $0xfc] sm:$0xf]
    %v94 = vld [vmem:[%s0 + $0x100] sm:$0xf]
    %v95 = vld [vmem:[%s0 + $0x104] sm:$0xf]
    %v96 = vld [vmem:[%s0 + $0x108] sm:$0xf]
    %v97 = vld [vmem:[%s0 + $0x10c] sm:$0xf]
    %v98 = vld [vmem:[%s0 + $0x110] sm:$0xf]
    %v99 = vld [vmem:[%s0 + $0x114] sm:$0xf]
    %v100 = vld [vmem:[%s0 + $0x118] sm:$0xf]
    %v101 = vld [vmem:[%s0 + $0x11c] sm:$0xf]
    %v102 = vld [vmem:[%s0 + $0x120] sm:$0xf]
    %v103 = vld [vmem:[%s0 + $0x124] sm:$0xf]
    %v104 = vld [vmem:[%s0 + $0x128] sm:$0xf]
    %v105 = vld [vmem:[%s0 + $0x12c] sm:$0xf]
    %v106 = vld [vmem:[%s0 + $0x130] sm:$0xf]
    %v107 = vld [vmem:[%s0 + $0x134] sm:$0xf]
    %v108 = vld [vmem:[%s0 + $0x138] sm:$0xf]
    %v109 = vld [vmem:[%s0 + $0x13c] sm:$0xf]
    %v110 = vld [vmem:[%s0 + $0x140] sm:$0xf]
    %v111 = vld [vmem:[%s0 + $0x144] sm:$0xf]
    %v112 = vld [vmem:[%s0 + $0x148] sm:$0xf]
    %v113 = vld [vmem:[%s0 + $0x14c] sm:$0xf]
    %v114 = vld [vmem:[%s0 + $0x150] sm:$0xf]
    %v115 = vld [vmem:[%s0 + $0x154] sm:$0xf]
    %v116 = vld [vmem:[%s0 + $0x158] sm:$0xf]
    %v117 = vld [vmem:[%s0 + $0x15c] sm:$0xf]
    %v118 = vld [vmem:[%s0 + $0x160] sm:$0xf]
    %v119 = vld [vmem:[%s0 + $0x164] sm:$0xf]
    %v120 = vld [vmem:[%s0 + $0x168] sm:$0xf]
    %v121 = vld [vmem:[%s0 + $0x16c] sm:$0xf]
    %v122 = vld [vmem:[%s0 + $0x170] sm:$0xf]
    %v123 = vld [vmem:[%s0 + $0x174] sm:$0xf]
    %v124 = vld [vmem:[%s0 + $0x178] sm:$0xf]
    %v125 = vld [vmem:[%s0 + $0x17c] sm:$0xf]
    %v126 = vld [vmem:[%s0 + $0x180] sm:$0xf]
    %v127 = vld [vmem:[%s0 + $0x184] sm:$0xf]
    %v128 = vld [vmem:[%s0 + $0x188] sm:$0xf]
    %v129 = vld [vmem:[%s0 + $0x18c] sm:$0xf]
    %v130 = vld [vmem:[%s0 + $0x190] sm:$0xf]
    %v131 = vld [vmem:[%s0 + $0x194] sm:$0xf]
    %v132 = vld [vmem:[%s0 + $0x198] sm:$0xf]
    %v133 = vld [vmem:[%s0 + $0x19c] sm:$0xf]
    %v134 = vld [vmem:[%s0 + $0x1a0] sm:$0xf]
    %v135 = vld [vmem:[%s0 + $0x1a4] sm:$0xf]
    %v136 = vld [vmem:[%s0 + $0x1a8] sm:$0xf]
    %v137 = vld [vmem:[%s0 + $0x1ac] sm:$0xf]
    %v138 = vld [vmem:[%s0 + $0x1b0] sm:$0xf]
    %v139 = vld [vmem:[%s0 + $0x1b4] sm:$0xf]
    %v140 = vld [vmem:[%s0 + $0x1b8] sm:$0xf]
    %v141 = vld [vmem:[%s0 + $0x1bc] sm:$0xf]
    %v142 = vld [vmem:[%s0 + $0x1c0] sm:$0xf]
    %v143 = vld [vmem:[%s0 + $0x1c4] sm:$0xf]
    %v144 = vld [vmem:[%s0 + $0x1c8] sm:$0xf]
    %v145 = vld [vmem:[%s0 + $0x1cc] sm:$0xf]
    %v146 = vld [vmem:[%s0 + $0x1d0] sm:$0xf]
    %v147 = vld [vmem:[%s0 + $0x1d4] sm:$0xf]
    %v148 = vld [vmem:[%s0 + $0x1d8] sm:$0xf]
    %v149 = vld [vmem:[%s0 + $0x1dc] sm:$0xf]
    %v150 = vld [vmem:[%s0 + $0x1e0] sm:$0xf]
    %v151 = vld [vmem:[%s0 + $0x1e4] sm:$0xf]
    %v152 = vld [vmem:[%s0 + $0x1e8] sm:$0xf]
    %v153 = vld [vmem:[%s0 + $0x1ec] sm:$0xf]
    %v154 = vld [vmem:[%s0 + $0x1f0] sm:$0xf]
    %v155 = vld [vmem:[%s0 + $0x1f4] sm:$0xf]
    %v156 = vld [vmem:[%s0 + $0x1f8] sm:$0xf]
    %v157 = vld [vmem:[%s0 + $0x1fc] sm:$0xf]
    %v158 = vld [vmem:[%s2] sm:$0xf]
    %v159 = vld [vmem:[%s2 + $0x4] sm:$0xf]
    %v160 = vld [vmem:[%s2 + $0x8] sm:$0xf]
    %v161 = vld [vmem:[%s2 + $0xc] sm:$0xf]
    %v162 = vld [vmem:[%s1] sm:$0xf]
    %v163 = vld [vmem:[%s1 + $0x4] sm:$0xf]
    %v164 = vld [vmem:[%s1 + $0x8] sm:$0xf]
    %v165 = vld [vmem:[%s1 + $0xc] sm:$0xf]
    %v166 = vld [vmem:[%s1 + $0x10] sm:$0xf]
    %v167 = vld [vmem:[%s1 + $0x14] sm:$0xf]
    %v168 = vld [vmem:[%s1 + $0x18] sm:$0xf]
    %v169 = vld [vmem:[%s1 + $0x1c] sm:$0xf]
    %v170 = vld [vmem:[%s1 + $0x20] sm:$0xf]
    %v171 = vld [vmem:[%s1 + $0x24] sm:$0xf]
    %v172 = vld [vmem:[%s1 + $0x28] sm:$0xf]
    %v173 = vld [vmem:[%s1 + $0x2c] sm:$0xf]
    %v174 = vld [vmem:[%s1 + $0x30] sm:$0xf]
    %v175 = vld [vmem:[%s1 + $0x34] sm:$0xf]
    %v176 = vld [vmem:[%s1 + $0x38] sm:$0xf]
    %v177 = vld [vmem:[%s1 + $0x3c] sm:$0xf]
    %v178 = vld [vmem:[%s1 + $0x40] sm:$0xf]
    %v179 = vld [vmem:[%s1 + $0x44] sm:$0xf]
    %v180 = vld [vmem:[%s1 + $0x48] sm:$0xf]
    %v181 = vld [vmem:[%s1 + $0x4c] sm:$0xf]
    %v182 = vld [vmem:[%s1 + $0x50] sm:$0xf]
    %v183 = vld [vmem:[%s1 + $0x54] sm:$0xf]
    %v184 = vld [vmem:[%s1 + $0x58] sm:$0xf]
    %v185 = vld [vmem:[%s1 + $0x5c] sm:$0xf]
    %v186 = vld [vmem:[%s1 + $0x60] sm:$0xf]
    %v187 = vld [vmem:[%s1 + $0x64] sm:$0xf]
    %v188 = vld [vmem:[%s1 + $0x68] sm:$0xf]
    %v189 = vld [vmem:[%s1 + $0x6c] sm:$0xf]
    %v190 = vld [vmem:[%s1 + $0x70] sm:$0xf]
    %v191 = vld [vmem:[%s1 + $0x74] sm:$0xf]
    %v192 = vld [vmem:[%s1 + $0x78] sm:$0xf]
    %v193 = vld [vmem:[%s1 + $0x7c] sm:$0xf]
    %v194 = vld [vmem:[%s1 + $0x80] sm:$0xf]
    %v195 = vld [vmem:[%s1 + $0x84] sm:$0xf]
    %v196 = vld [vmem:[%s1 + $0x88] sm:$0xf]
    %v197 = vld [vmem:[%s1 + $0x8c] sm:$0xf]
    %v198 = vld [vmem:[%s1 + $0x90] sm:$0xf]
    %v199 = vld [vmem:[%s1 + $0x94] sm:$0xf]
    %v200 = vld [vmem:[%s1 + $0x98] sm:$0xf]
    %v201 = vld [vmem:[%s1 + $0x9c] sm:$0xf]
    %v202 = vld [vmem:[%s1 + $0xa0] sm:$0xf]
    %v203 = vld [vmem:[%s1 + $0xa4] sm:$0xf]
    %v204 = vld [vmem:[%s1 + $0xa8] sm:$0xf]
    %v205 = vld [vmem:[%s1 + $0xac] sm:$0xf]
    %v206 = vld [vmem:[%s1 + $0xb0] sm:$0xf]
    %v207 = vld [vmem:[%s1 + $0xb4] sm:$0xf]
    %v208 = vld [vmem:[%s1 + $0xb8] sm:$0xf]
    %v209 = vld [vmem:[%s1 + $0xbc] sm:$0xf]
    %v210 = vld [vmem:[%s1 + $0xc0] sm:$0xf]
    %v211 = vld [vmem:[%s1 + $0xc4] sm:$0xf]
    %v212 = vld [vmem:[%s1 + $0xc8] sm:$0xf]
    %v213 = vld [vmem:[%s1 + $0xcc] sm:$0xf]
    %v214 = vld [vmem:[%s1 + $0xd0] sm:$0xf]
    %v215 = vld [vmem:[%s1 + $0xd4] sm:$0xf]
    %v216 = vld [vmem:[%s1 + $0xd8] sm:$0xf]
    %v217 = vld [vmem:[%s1 + $0xdc] sm:$0xf]
    %v218 = vld [vmem:[%s1 + $0xe0] sm:$0xf]
    %v219 = vld [vmem:[%s1 + $0xe4] sm:$0xf]
    %v220 = vld [vmem:[%s1 + $0xe8] sm:$0xf]
    %v221 = vld [vmem:[%s1 + $0xec] sm:$0xf]
    %v222 = vld [vmem:[%s1 + $0xf0] sm:$0xf]
    %v223 = vld [vmem:[%s1 + $0xf4] sm:$0xf]
    %v224 = vld [vmem:[%s1 + $0xf8] sm:$0xf]
    %v225 = vld [vmem:[%s1 + $0xfc] sm:$0xf]
    %v226 = vld [vmem:[%s1 + $0x100] sm:$0xf]
    %v227 = vld [vmem:[%s1 + $0x104] sm:$0xf]
    %v228 = vld [vmem:[%s1 + $0x108] sm:$0xf]
    %v229 = vld [vmem:[%s1 + $0x10c] sm:$0xf]
    %v230 = vld [vmem:[%s1 + $0x110] sm:$0xf]
    %v231 = vld [vmem:[%s1 + $0x114] sm:$0xf]
    %v232 = vld [vmem:[%s1 + $0x118] sm:$0xf]
    %v233 = vld [vmem:[%s1 + $0x11c] sm:$0xf]
    %v234 = vld [vmem:[%s1 + $0x120] sm:$0xf]
    %v235 = vld [vmem:[%s1 + $0x124] sm:$0xf]
    %v236 = vld [vmem:[%s1 + $0x128] sm:$0xf]
    %v237 = vld [vmem:[%s1 + $0x12c] sm:$0xf]
    %v238 = vld [vmem:[%s1 + $0x130] sm:$0xf]
    %v239 = vld [vmem:[%s1 + $0x134] sm:$0xf]
    %v240 = vld [vmem:[%s1 + $0x138] sm:$0xf]
    %v241 = vld [vmem:[%s1 + $0x13c] sm:$0xf]
    %v242 = vld [vmem:[%s1 + $0x140] sm:$0xf]
    %v243 = vld [vmem:[%s1 + $0x144] sm:$0xf]
    %v244 = vld [vmem:[%s1 + $0x148] sm:$0xf]
    %v245 = vld [vmem:[%s1 + $0x14c] sm:$0xf]
    %v246 = vld [vmem:[%s1 + $0x150] sm:$0xf]
    %v247 = vld [vmem:[%s1 + $0x154] sm:$0xf]
    %v248 = vld [vmem:[%s1 + $0x158] sm:$0xf]
    %v249 = vld [vmem:[%s1 + $0x15c] sm:$0xf]
    %v250 = vld [vmem:[%s1 + $0x160] sm:$0xf]
    %v251 = vld [vmem:[%s1 + $0x164] sm:$0xf]
    %v252 = vld [vmem:[%s1 + $0x168] sm:$0xf]
    %v253 = vld [vmem:[%s1 + $0x16c] sm:$0xf]
    %v254 = vld [vmem:[%s1 + $0x170] sm:$0xf]
    %v255 = vld [vmem:[%s1 + $0x174] sm:$0xf]
    %v256 = vld [vmem:[%s1 + $0x178] sm:$0xf]
    %v257 = vld [vmem:[%s1 + $0x17c] sm:$0xf]
    %v258 = vld [vmem:[%s1 + $0x180] sm:$0xf]
    %v259 = vld [vmem:[%s1 + $0x184] sm:$0xf]
    %v260 = vld [vmem:[%s1 + $0x188] sm:$0xf]
    %v261 = vld [vmem:[%s1 + $0x18c] sm:$0xf]
    %v262 = vld [vmem:[%s1 + $0x190] sm:$0xf]
    %v263 = vld [vmem:[%s1 + $0x194] sm:$0xf]
    %v264 = vld [vmem:[%s1 + $0x198] sm:$0xf]
    %v265 = vld [vmem:[%s1 + $0x19c] sm:$0xf]
    %v266 = vld [vmem:[%s1 + $0x1a0] sm:$0xf]
    %v267 = vld [vmem:[%s1 + $0x1a4] sm:$0xf]
    %v268 = vld [vmem:[%s1 + $0x1a8] sm:$0xf]
    %v269 = vld [vmem:[%s1 + $0x1ac] sm:$0xf]
    %v270 = vld [vmem:[%s1 + $0x1b0] sm:$0xf]
    %v271 = vld [vmem:[%s1 + $0x1b4] sm:$0xf]
    %v272 = vld [vmem:[%s1 + $0x1b8] sm:$0xf]
    %v273 = vld [vmem:[%s1 + $0x1bc] sm:$0xf]
    %v274 = vld [vmem:[%s1 + $0x1c0] sm:$0xf]
    %v275 = vld [vmem:[%s1 + $0x1c4] sm:$0xf]
    %v276 = vld [vmem:[%s1 + $0x1c8] sm:$0xf]
    %v277 = vld [vmem:[%s1 + $0x1cc] sm:$0xf]
    %v278 = vld [vmem:[%s1 + $0x1d0] sm:$0xf]
    %v279 = vld [vmem:[%s1 + $0x1d4] sm:$0xf]
    %v280 = vld [vmem:[%s1 + $0x1d8] sm:$0xf]
    %v281 = vld [vmem:[%s1 + $0x1dc] sm:$0xf]
    %v282 = vld [vmem:[%s1 + $0x1e0] sm:$0xf]
    %v283 = vld [vmem:[%s1 + $0x1e4] sm:$0xf]
    %v284 = vld [vmem:[%s1 + $0x1e8] sm:$0xf]
    %v285 = vld [vmem:[%s1 + $0x1ec] sm:$0xf]
    %v286 = vld [vmem:[%s1 + $0x1f0] sm:$0xf]
    %v287 = vld [vmem:[%s1 + $0x1f4] sm:$0xf]
    %v288 = vld [vmem:[%s1 + $0x1f8] sm:$0xf]
    %v289 = vld [vmem:[%s1 + $0x1fc] sm:$0xf]
    %v290 = vld [vmem:[%s3] sm:$0xf]
    %v291 = vld [vmem:[%s3 + $0x4] sm:$0xf]
    %v292 = vld [vmem:[%s3 + $0x8] sm:$0xf]
    %v293 = vld [vmem:[%s3 + $0xc] sm:$0xf]
    %v422 = vunpack.c.l.b16 %v162
    %v423 = vunpack.c.l.b16 %v163
    %v424 = vunpack.c.l.b16 %v164
    %v425 = vunpack.c.l.b16 %v165
    %v426 = vunpack.c.l.b16 %v166
    %v427 = vunpack.c.l.b16 %v167
    %v428 = vunpack.c.l.b16 %v168
    %v429 = vunpack.c.l.b16 %v169
    %v430 = vunpack.c.l.b16 %v170
    %v431 = vunpack.c.l.b16 %v171
    %v432 = vunpack.c.l.b16 %v172
    %v433 = vunpack.c.l.b16 %v173
    %v434 = vunpack.c.l.b16 %v174
    %v435 = vunpack.c.l.b16 %v175
    %v436 = vunpack.c.l.b16 %v176
    %v437 = vunpack.c.l.b16 %v177
    %v438 = vunpack.c.l.b16 %v178
    %v439 = vunpack.c.l.b16 %v179
    %v440 = vunpack.c.l.b16 %v180
    %v441 = vunpack.c.l.b16 %v181
    %v442 = vunpack.c.l.b16 %v182
    %v443 = vunpack.c.l.b16 %v183
    %v444 = vunpack.c.l.b16 %v184
    %v445 = vunpack.c.l.b16 %v185
    %v446 = vunpack.c.l.b16 %v186
    %v447 = vunpack.c.l.b16 %v187
    %v448 = vunpack.c.l.b16 %v188
    %v449 = vunpack.c.l.b16 %v189
    %v450 = vunpack.c.l.b16 %v190
    %v451 = vunpack.c.l.b16 %v191
    %v452 = vunpack.c.l.b16 %v192
    %v453 = vunpack.c.l.b16 %v193
    %v454 = vunpack.c.l.b16 %v194
    %v455 = vunpack.c.l.b16 %v195
    %v456 = vunpack.c.l.b16 %v196
    %v457 = vunpack.c.l.b16 %v197
    %v458 = vunpack.c.l.b16 %v198
    %v459 = vunpack.c.l.b16 %v199
    %v460 = vunpack.c.l.b16 %v200
    %v461 = vunpack.c.l.b16 %v201
    %v462 = vunpack.c.l.b16 %v202
    %v463 = vunpack.c.l.b16 %v203
    %v464 = vunpack.c.l.b16 %v204
    %v465 = vunpack.c.l.b16 %v205
    %v466 = vunpack.c.l.b16 %v206
    %v467 = vunpack.c.l.b16 %v207
    %v468 = vunpack.c.l.b16 %v208
    %v469 = vunpack.c.l.b16 %v209
    %v470 = vunpack.c.l.b16 %v210
    %v471 = vunpack.c.l.b16 %v211
    %v472 = vunpack.c.l.b16 %v212
    %v473 = vunpack.c.l.b16 %v213
    %v474 = vunpack.c.l.b16 %v214
    %v475 = vunpack.c.l.b16 %v215
    %v476 = vunpack.c.l.b16 %v216
    %v477 = vunpack.c.l.b16 %v217
    %v478 = vunpack.c.l.b16 %v218
    %v479 = vunpack.c.l.b16 %v219
    %v480 = vunpack.c.l.b16 %v220
    %v481 = vunpack.c.l.b16 %v221
    %v482 = vunpack.c.l.b16 %v222
    %v483 = vunpack.c.l.b16 %v223
    %v484 = vunpack.c.l.b16 %v224
    %v485 = vunpack.c.l.b16 %v225
    %v486 = vunpack.c.l.b16 %v226
    %v487 = vunpack.c.l.b16 %v227
    %v488 = vunpack.c.l.b16 %v228
    %v489 = vunpack.c.l.b16 %v229
    %v490 = vunpack.c.l.b16 %v230
    %v491 = vunpack.c.l.b16 %v231
    %v492 = vunpack.c.l.b16 %v232
    %v493 = vunpack.c.l.b16 %v233
    %v494 = vunpack.c.l.b16 %v234
    %v495 = vunpack.c.l.b16 %v235
    %v496 = vunpack.c.l.b16 %v236
    %v497 = vunpack.c.l.b16 %v237
    %v498 = vunpack.c.l.b16 %v238
    %v499 = vunpack.c.l.b16 %v239
    %v500 = vunpack.c.l.b16 %v240
    %v501 = vunpack.c.l.b16 %v241
    %v502 = vunpack.c.l.b16 %v242
    %v503 = vunpack.c.l.b16 %v243
    %v504 = vunpack.c.l.b16 %v244
    %v505 = vunpack.c.l.b16 %v245
    %v506 = vunpack.c.l.b16 %v246
    %v507 = vunpack.c.l.b16 %v247
    %v508 = vunpack.c.l.b16 %v248
    %v509 = vunpack.c.l.b16 %v249
    %v510 = vunpack.c.l.b16 %v250
    %v511 = vunpack.c.l.b16 %v251
    %v512 = vunpack.c.l.b16 %v252
    %v513 = vunpack.c.l.b16 %v253
    %v514 = vunpack.c.l.b16 %v254
    %v515 = vunpack.c.l.b16 %v255
    %v516 = vunpack.c.l.b16 %v256
    %v517 = vunpack.c.l.b16 %v257
    %v518 = vunpack.c.l.b16 %v258
    %v519 = vunpack.c.l.b16 %v259
    %v520 = vunpack.c.l.b16 %v260
    %v521 = vunpack.c.l.b16 %v261
    %v522 = vunpack.c.l.b16 %v262
    %v523 = vunpack.c.l.b16 %v263
    %v524 = vunpack.c.l.b16 %v264
    %v525 = vunpack.c.l.b16 %v265
    %v526 = vunpack.c.l.b16 %v266
    %v527 = vunpack.c.l.b16 %v267
    %v528 = vunpack.c.l.b16 %v268
    %v529 = vunpack.c.l.b16 %v269
    %v530 = vunpack.c.l.b16 %v270
    %v531 = vunpack.c.l.b16 %v271
    %v532 = vunpack.c.l.b16 %v272
    %v533 = vunpack.c.l.b16 %v273
    %v534 = vunpack.c.l.b16 %v274
    %v535 = vunpack.c.l.b16 %v275
    %v536 = vunpack.c.l.b16 %v276
    %v537 = vunpack.c.l.b16 %v277
    %v538 = vunpack.c.l.b16 %v278
    %v539 = vunpack.c.l.b16 %v279
    %v540 = vunpack.c.l.b16 %v280
    %v541 = vunpack.c.l.b16 %v281
    %v542 = vunpack.c.l.b16 %v282
    %v543 = vunpack.c.l.b16 %v283
    %v544 = vunpack.c.l.b16 %v284
    %v545 = vunpack.c.l.b16 %v285
    %v546 = vunpack.c.l.b16 %v286
    %v547 = vunpack.c.l.b16 %v287
    %v548 = vunpack.c.l.b16 %v288
    %v549 = vunpack.c.l.b16 %v289
    %v550 = vpack.c.b16 %v423, %v422
    %v551 = vpack.c.b16 %v425, %v424
    %v552 = vpack.c.b16 %v427, %v426
    %v553 = vpack.c.b16 %v429, %v428
    %v554 = vpack.c.b16 %v431, %v430
    %v555 = vpack.c.b16 %v433, %v432
    %v556 = vpack.c.b16 %v435, %v434
    %v557 = vpack.c.b16 %v437, %v436
    %v558 = vpack.c.b16 %v439, %v438
    %v559 = vpack.c.b16 %v441, %v440
    %v560 = vpack.c.b16 %v443, %v442
    %v561 = vpack.c.b16 %v445, %v444
    %v562 = vpack.c.b16 %v447, %v446
    %v563 = vpack.c.b16 %v449, %v448
    %v564 = vpack.c.b16 %v451, %v450
    %v565 = vpack.c.b16 %v453, %v452
    %v566 = vpack.c.b16 %v455, %v454
    %v567 = vpack.c.b16 %v457, %v456
    %v568 = vpack.c.b16 %v459, %v458
    %v569 = vpack.c.b16 %v461, %v460
    %v570 = vpack.c.b16 %v463, %v462
    %v571 = vpack.c.b16 %v465, %v464
    %v572 = vpack.c.b16 %v467, %v466
    %v573 = vpack.c.b16 %v469, %v468
    %v574 = vpack.c.b16 %v471, %v470
    %v575 = vpack.c.b16 %v473, %v472
    %v576 = vpack.c.b16 %v475, %v474
    %v577 = vpack.c.b16 %v477, %v476
    %v578 = vpack.c.b16 %v479, %v478
    %v579 = vpack.c.b16 %v481, %v480
    %v580 = vpack.c.b16 %v483, %v482
    %v581 = vpack.c.b16 %v485, %v484
    %v582 = vpack.c.b16 %v487, %v486
    %v583 = vpack.c.b16 %v489, %v488
    %v584 = vpack.c.b16 %v491, %v490
    %v585 = vpack.c.b16 %v493, %v492
    %v586 = vpack.c.b16 %v495, %v494
    %v587 = vpack.c.b16 %v497, %v496
    %v588 = vpack.c.b16 %v499, %v498
    %v589 = vpack.c.b16 %v501, %v500
    %v590 = vpack.c.b16 %v503, %v502
    %v591 = vpack.c.b16 %v505, %v504
    %v592 = vpack.c.b16 %v507, %v506
    %v593 = vpack.c.b16 %v509, %v508
    %v594 = vpack.c.b16 %v511, %v510
    %v595 = vpack.c.b16 %v513, %v512
    %v596 = vpack.c.b16 %v515, %v514
    %v597 = vpack.c.b16 %v517, %v516
    %v598 = vpack.c.b16 %v519, %v518
    %v599 = vpack.c.b16 %v521, %v520
    %v600 = vpack.c.b16 %v523, %v522
    %v601 = vpack.c.b16 %v525, %v524
    %v602 = vpack.c.b16 %v527, %v526
    %v603 = vpack.c.b16 %v529, %v528
    %v604 = vpack.c.b16 %v531, %v530
    %v605 = vpack.c.b16 %v533, %v532
    %v606 = vpack.c.b16 %v535, %v534
    %v607 = vpack.c.b16 %v537, %v536
    %v608 = vpack.c.b16 %v539, %v538
    %v609 = vpack.c.b16 %v541, %v540
    %v610 = vpack.c.b16 %v543, %v542
    %v611 = vpack.c.b16 %v545, %v544
    %v612 = vpack.c.b16 %v547, %v546
    %v613 = vpack.c.b16 %v549, %v548
    %v618 = vunpack.c.l.b16 %v290
    %v619 = vunpack.c.l.b16 %v291
    %v620 = vunpack.c.l.b16 %v292
    %v621 = vunpack.c.l.b16 %v293
    %v622 = vpack.c.b16 %v619, %v618
    %v623 = vpack.c.b16 %v621, %v620
    %vm626 = vcmask 261120
    %v628 = vsel %vm626, %v550, 0
    %v631 = vsel %vm626, %v551, 0
    %v634 = vsel %vm626, %v552, 0
    %v637 = vsel %vm626, %v553, 0
    %v640 = vsel %vm626, %v554, 0
    %v643 = vsel %vm626, %v555, 0
    %v646 = vsel %vm626, %v556, 0
    %v649 = vsel %vm626, %v557, 0
    %v652 = vsel %vm626, %v558, 0
    %v655 = vsel %vm626, %v559, 0
    %v658 = vsel %vm626, %v560, 0
    %v661 = vsel %vm626, %v561, 0
    %v664 = vsel %vm626, %v562, 0
    %v667 = vsel %vm626, %v563, 0
    %v670 = vsel %vm626, %v564, 0
    %v673 = vsel %vm626, %v565, 0
    %v676 = vsel %vm626, %v566, 0
    %v679 = vsel %vm626, %v567, 0
    %v682 = vsel %vm626, %v568, 0
    %v685 = vsel %vm626, %v569, 0
    %v688 = vsel %vm626, %v570, 0
    %v691 = vsel %vm626, %v571, 0
    %v694 = vsel %vm626, %v572, 0
    %v697 = vsel %vm626, %v573, 0
    %v700 = vsel %vm626, %v574, 0
    %v703 = vsel %vm626, %v575, 0
    %v706 = vsel %vm626, %v576, 0
    %v709 = vsel %vm626, %v577, 0
    %v712 = vsel %vm626, %v578, 0
    %v715 = vsel %vm626, %v579, 0
    %v718 = vsel %vm626, %v580, 0
    %v721 = vsel %vm626, %v581, 0
    %v724 = vsel %vm626, %v582, 0
    %v727 = vsel %vm626, %v583, 0
    %v730 = vsel %vm626, %v584, 0
    %v733 = vsel %vm626, %v585, 0
    %v736 = vsel %vm626, %v586, 0
    %v739 = vsel %vm626, %v587, 0
    %v742 = vsel %vm626, %v588, 0
    %v745 = vsel %vm626, %v589, 0
    %v748 = vsel %vm626, %v590, 0
    %v751 = vsel %vm626, %v591, 0
    %v754 = vsel %vm626, %v592, 0
    %v757 = vsel %vm626, %v593, 0
    %v760 = vsel %vm626, %v594, 0
    %v763 = vsel %vm626, %v595, 0
    %v766 = vsel %vm626, %v596, 0
    %v769 = vsel %vm626, %v597, 0
    %v772 = vsel %vm626, %v598, 0
    %v775 = vsel %vm626, %v599, 0
    %v778 = vsel %vm626, %v600, 0
    %v781 = vsel %vm626, %v601, 0
    %v784 = vsel %vm626, %v602, 0
    %v787 = vsel %vm626, %v603, 0
    %v790 = vsel %vm626, %v604, 0
    %v793 = vsel %vm626, %v605, 0
    %v796 = vsel %vm626, %v606, 0
    %v799 = vsel %vm626, %v607, 0
    %v802 = vsel %vm626, %v608, 0
    %v805 = vsel %vm626, %v609, 0
    %v808 = vsel %vm626, %v610, 0
    %v811 = vsel %vm626, %v611, 0
    %v814 = vsel %vm626, %v612, 0
    %v817 = vsel %vm626, %v613, 0
    %819 = vmatpush.bf16.msra.mxu0 0
    %820 = vmatpush.bf16.msra.mxu0 0
    %821 = vmatpush.bf16.msra.mxu0 0
    %822 = vmatpush.bf16.msra.mxu0 0
    %823 = vmatpush.bf16.msra.mxu0 0
    %824 = vmatpush.bf16.msra.mxu0 0
    %825 = vmatpush.bf16.msra.mxu0 %v623
    %826 = vmatpush.bf16.msra.mxu0 %v622
    %827 = vmatmul.bf16.gmra.mxu0 %v628
    %v828 = vpop.f32.mrf.mxu0
    %v829 = vadd.f32 0.0, %v828
    %v830 = vpop.f32.mrf.mxu0
    %v831 = vadd.f32 0.0, %v830
    %832 = vmatmul.bf16.gmra.mxu0 %v631
    %v833 = vpop.f32.mrf.mxu0
    %v834 = vadd.f32 0.0, %v833
    %v835 = vpop.f32.mrf.mxu0
    %v836 = vadd.f32 0.0, %v835
    %837 = vmatmul.bf16.gmra.mxu0 %v634
    %v838 = vpop.f32.mrf.mxu0
    %v839 = vadd.f32 0.0, %v838
    %v840 = vpop.f32.mrf.mxu0
    %v841 = vadd.f32 0.0, %v840
    %842 = vmatmul.bf16.gmra.mxu0 %v637
    %v843 = vpop.f32.mrf.mxu0
    %v844 = vadd.f32 0.0, %v843
    %v845 = vpop.f32.mrf.mxu0
    %v846 = vadd.f32 0.0, %v845
    %847 = vmatmul.bf16.gmra.mxu0 %v640
    %v848 = vpop.f32.mrf.mxu0
    %v849 = vadd.f32 0.0, %v848
    %v850 = vpop.f32.mrf.mxu0
    %v851 = vadd.f32 0.0, %v850
    %852 = vmatmul.bf16.gmra.mxu0 %v643
    %v853 = vpop.f32.mrf.mxu0
    %v854 = vadd.f32 0.0, %v853
    %v855 = vpop.f32.mrf.mxu0
    %v856 = vadd.f32 0.0, %v855
    %857 = vmatmul.bf16.gmra.mxu0 %v646
    %v858 = vpop.f32.mrf.mxu0
    %v859 = vadd.f32 0.0, %v858
    %v860 = vpop.f32.mrf.mxu0
    %v861 = vadd.f32 0.0, %v860
    %862 = vmatmul.bf16.gmra.mxu0 %v649
    %v863 = vpop.f32.mrf.mxu0
    %v864 = vadd.f32 0.0, %v863
    %v865 = vpop.f32.mrf.mxu0
    %v866 = vadd.f32 0.0, %v865
    %867 = vmatmul.bf16.gmra.mxu0 %v652
    %v868 = vpop.f32.mrf.mxu0
    %v869 = vadd.f32 0.0, %v868
    %v870 = vpop.f32.mrf.mxu0
    %v871 = vadd.f32 0.0, %v870
    %872 = vmatmul.bf16.gmra.mxu0 %v655
    %v873 = vpop.f32.mrf.mxu0
    %v874 = vadd.f32 0.0, %v873
    %v875 = vpop.f32.mrf.mxu0
    %v876 = vadd.f32 0.0, %v875
    %877 = vmatmul.bf16.gmra.mxu0 %v658
    %v878 = vpop.f32.mrf.mxu0
    %v879 = vadd.f32 0.0, %v878
    %v880 = vpop.f32.mrf.mxu0
    %v881 = vadd.f32 0.0, %v880
    %882 = vmatmul.bf16.gmra.mxu0 %v661
    %v883 = vpop.f32.mrf.mxu0
    %v884 = vadd.f32 0.0, %v883
    %v885 = vpop.f32.mrf.mxu0
    %v886 = vadd.f32 0.0, %v885
    %887 = vmatmul.bf16.gmra.mxu0 %v664
    %v888 = vpop.f32.mrf.mxu0
    %v889 = vadd.f32 0.0, %v888
    %v890 = vpop.f32.mrf.mxu0
    %v891 = vadd.f32 0.0, %v890
    %892 = vmatmul.bf16.gmra.mxu0 %v667
    %v893 = vpop.f32.mrf.mxu0
    %v894 = vadd.f32 0.0, %v893
    %v895 = vpop.f32.mrf.mxu0
    %v896 = vadd.f32 0.0, %v895
    %897 = vmatmul.bf16.gmra.mxu0 %v670
    %v898 = vpop.f32.mrf.mxu0
    %v899 = vadd.f32 0.0, %v898
    %v900 = vpop.f32.mrf.mxu0
    %v901 = vadd.f32 0.0, %v900
    %902 = vmatmul.bf16.gmra.mxu0 %v673
    %v903 = vpop.f32.mrf.mxu0
    %v904 = vadd.f32 0.0, %v903
    %v905 = vpop.f32.mrf.mxu0
    %v906 = vadd.f32 0.0, %v905
    %907 = vmatmul.bf16.gmra.mxu0 %v676
    %v908 = vpop.f32.mrf.mxu0
    %v909 = vadd.f32 0.0, %v908
    %v910 = vpop.f32.mrf.mxu0
    %v911 = vadd.f32 0.0, %v910
    %912 = vmatmul.bf16.gmra.mxu0 %v679
    %v913 = vpop.f32.mrf.mxu0
    %v914 = vadd.f32 0.0, %v913
    %v915 = vpop.f32.mrf.mxu0
    %v916 = vadd.f32 0.0, %v915
    %917 = vmatmul.bf16.gmra.mxu0 %v682
    %v918 = vpop.f32.mrf.mxu0
    %v919 = vadd.f32 0.0, %v918
    %v920 = vpop.f32.mrf.mxu0
    %v921 = vadd.f32 0.0, %v920
    %922 = vmatmul.bf16.gmra.mxu0 %v685
    %v923 = vpop.f32.mrf.mxu0
    %v924 = vadd.f32 0.0, %v923
    %v925 = vpop.f32.mrf.mxu0
    %v926 = vadd.f32 0.0, %v925
    %927 = vmatmul.bf16.gmra.mxu0 %v688
    %v928 = vpop.f32.mrf.mxu0
    %v929 = vadd.f32 0.0, %v928
    %v930 = vpop.f32.mrf.mxu0
    %v931 = vadd.f32 0.0, %v930
    %932 = vmatmul.bf16.gmra.mxu0 %v691
    %v933 = vpop.f32.mrf.mxu0
    %v934 = vadd.f32 0.0, %v933
    %v935 = vpop.f32.mrf.mxu0
    %v936 = vadd.f32 0.0, %v935
    %937 = vmatmul.bf16.gmra.mxu0 %v694
    %v938 = vpop.f32.mrf.mxu0
    %v939 = vadd.f32 0.0, %v938
    %v940 = vpop.f32.mrf.mxu0
    %v941 = vadd.f32 0.0, %v940
    %942 = vmatmul.bf16.gmra.mxu0 %v697
    %v943 = vpop.f32.mrf.mxu0
    %v944 = vadd.f32 0.0, %v943
    %v945 = vpop.f32.mrf.mxu0
    %v946 = vadd.f32 0.0, %v945
    %947 = vmatmul.bf16.gmra.mxu0 %v700
    %v948 = vpop.f32.mrf.mxu0
    %v949 = vadd.f32 0.0, %v948
    %v950 = vpop.f32.mrf.mxu0
    %v951 = vadd.f32 0.0, %v950
    %952 = vmatmul.bf16.gmra.mxu0 %v703
    %v953 = vpop.f32.mrf.mxu0
    %v954 = vadd.f32 0.0, %v953
    %v955 = vpop.f32.mrf.mxu0
    %v956 = vadd.f32 0.0, %v955
    %957 = vmatmul.bf16.gmra.mxu0 %v706
    %v958 = vpop.f32.mrf.mxu0
    %v959 = vadd.f32 0.0, %v958
    %v960 = vpop.f32.mrf.mxu0
    %v961 = vadd.f32 0.0, %v960
    %962 = vmatmul.bf16.gmra.mxu0 %v709
    %v963 = vpop.f32.mrf.mxu0
    %v964 = vadd.f32 0.0, %v963
    %v965 = vpop.f32.mrf.mxu0
    %v966 = vadd.f32 0.0, %v965
    %967 = vmatmul.bf16.gmra.mxu0 %v712
    %v968 = vpop.f32.mrf.mxu0
    %v969 = vadd.f32 0.0, %v968
    %v970 = vpop.f32.mrf.mxu0
    %v971 = vadd.f32 0.0, %v970
    %972 = vmatmul.bf16.gmra.mxu0 %v715
    %v973 = vpop.f32.mrf.mxu0
    %v974 = vadd.f32 0.0, %v973
    %v975 = vpop.f32.mrf.mxu0
    %v976 = vadd.f32 0.0, %v975
    %977 = vmatmul.bf16.gmra.mxu0 %v718
    %v978 = vpop.f32.mrf.mxu0
    %v979 = vadd.f32 0.0, %v978
    %v980 = vpop.f32.mrf.mxu0
    %v981 = vadd.f32 0.0, %v980
    %982 = vmatmul.bf16.gmra.mxu0 %v721
    %v983 = vpop.f32.mrf.mxu0
    %v984 = vadd.f32 0.0, %v983
    %v985 = vpop.f32.mrf.mxu0
    %v986 = vadd.f32 0.0, %v985
    %987 = vmatmul.bf16.gmra.mxu0 %v724
    %v988 = vpop.f32.mrf.mxu0
    %v989 = vadd.f32 0.0, %v988
    %v990 = vpop.f32.mrf.mxu0
    %v991 = vadd.f32 0.0, %v990
    %992 = vmatmul.bf16.gmra.mxu0 %v727
    %v993 = vpop.f32.mrf.mxu0
    %v994 = vadd.f32 0.0, %v993
    %v995 = vpop.f32.mrf.mxu0
    %v996 = vadd.f32 0.0, %v995
    %997 = vmatmul.bf16.gmra.mxu0 %v730
    %v998 = vpop.f32.mrf.mxu0
    %v999 = vadd.f32 0.0, %v998
    %v1000 = vpop.f32.mrf.mxu0
    %v1001 = vadd.f32 0.0, %v1000
    %1002 = vmatmul.bf16.gmra.mxu0 %v733
    %v1003 = vpop.f32.mrf.mxu0
    %v1004 = vadd.f32 0.0, %v1003
    %v1005 = vpop.f32.mrf.mxu0
    %v1006 = vadd.f32 0.0, %v1005
    %1007 = vmatmul.bf16.gmra.mxu0 %v736
    %v1008 = vpop.f32.mrf.mxu0
    %v1009 = vadd.f32 0.0, %v1008
    %v1010 = vpop.f32.mrf.mxu0
    %v1011 = vadd.f32 0.0, %v1010
    %1012 = vmatmul.bf16.gmra.mxu0 %v739
    %v1013 = vpop.f32.mrf.mxu0
    %v1014 = vadd.f32 0.0, %v1013
    %v1015 = vpop.f32.mrf.mxu0
    %v1016 = vadd.f32 0.0, %v1015
    %1017 = vmatmul.bf16.gmra.mxu0 %v742
    %v1018 = vpop.f32.mrf.mxu0
    %v1019 = vadd.f32 0.0, %v1018
    %v1020 = vpop.f32.mrf.mxu0
    %v1021 = vadd.f32 0.0, %v1020
    %1022 = vmatmul.bf16.gmra.mxu0 %v745
    %v1023 = vpop.f32.mrf.mxu0
    %v1024 = vadd.f32 0.0, %v1023
    %v1025 = vpop.f32.mrf.mxu0
    %v1026 = vadd.f32 0.0, %v1025
    %1027 = vmatmul.bf16.gmra.mxu0 %v748
    %v1028 = vpop.f32.mrf.mxu0
    %v1029 = vadd.f32 0.0, %v1028
    %v1030 = vpop.f32.mrf.mxu0
    %v1031 = vadd.f32 0.0, %v1030
    %1032 = vmatmul.bf16.gmra.mxu0 %v751
    %v1033 = vpop.f32.mrf.mxu0
    %v1034 = vadd.f32 0.0, %v1033
    %v1035 = vpop.f32.mrf.mxu0
    %v1036 = vadd.f32 0.0, %v1035
    %1037 = vmatmul.bf16.gmra.mxu0 %v754
    %v1038 = vpop.f32.mrf.mxu0
    %v1039 = vadd.f32 0.0, %v1038
    %v1040 = vpop.f32.mrf.mxu0
    %v1041 = vadd.f32 0.0, %v1040
    %1042 = vmatmul.bf16.gmra.mxu0 %v757
    %v1043 = vpop.f32.mrf.mxu0
    %v1044 = vadd.f32 0.0, %v1043
    %v1045 = vpop.f32.mrf.mxu0
    %v1046 = vadd.f32 0.0, %v1045
    %1047 = vmatmul.bf16.gmra.mxu0 %v760
    %v1048 = vpop.f32.mrf.mxu0
    %v1049 = vadd.f32 0.0, %v1048
    %v1050 = vpop.f32.mrf.mxu0
    %v1051 = vadd.f32 0.0, %v1050
    %1052 = vmatmul.bf16.gmra.mxu0 %v763
    %v1053 = vpop.f32.mrf.mxu0
    %v1054 = vadd.f32 0.0, %v1053
    %v1055 = vpop.f32.mrf.mxu0
    %v1056 = vadd.f32 0.0, %v1055
    %1057 = vmatmul.bf16.gmra.mxu0 %v766
    %v1058 = vpop.f32.mrf.mxu0
    %v1059 = vadd.f32 0.0, %v1058
    %v1060 = vpop.f32.mrf.mxu0
    %v1061 = vadd.f32 0.0, %v1060
    %1062 = vmatmul.bf16.gmra.mxu0 %v769
    %v1063 = vpop.f32.mrf.mxu0
    %v1064 = vadd.f32 0.0, %v1063
    %v1065 = vpop.f32.mrf.mxu0
    %v1066 = vadd.f32 0.0, %v1065
    %1067 = vmatmul.bf16.gmra.mxu0 %v772
    %v1068 = vpop.f32.mrf.mxu0
    %v1069 = vadd.f32 0.0, %v1068
    %v1070 = vpop.f32.mrf.mxu0
    %v1071 = vadd.f32 0.0, %v1070
    %1072 = vmatmul.bf16.gmra.mxu0 %v775
    %v1073 = vpop.f32.mrf.mxu0
    %v1074 = vadd.f32 0.0, %v1073
    %v1075 = vpop.f32.mrf.mxu0
    %v1076 = vadd.f32 0.0, %v1075
    %1077 = vmatmul.bf16.gmra.mxu0 %v778
    %v1078 = vpop.f32.mrf.mxu0
    %v1079 = vadd.f32 0.0, %v1078
    %v1080 = vpop.f32.mrf.mxu0
    %v1081 = vadd.f32 0.0, %v1080
    %1082 = vmatmul.bf16.gmra.mxu0 %v781
    %v1083 = vpop.f32.mrf.mxu0
    %v1084 = vadd.f32 0.0, %v1083
    %v1085 = vpop.f32.mrf.mxu0
    %v1086 = vadd.f32 0.0, %v1085
    %1087 = vmatmul.bf16.gmra.mxu0 %v784
    %v1088 = vpop.f32.mrf.mxu0
    %v1089 = vadd.f32 0.0, %v1088
    %v1090 = vpop.f32.mrf.mxu0
    %v1091 = vadd.f32 0.0, %v1090
    %1092 = vmatmul.bf16.gmra.mxu0 %v787
    %v1093 = vpop.f32.mrf.mxu0
    %v1094 = vadd.f32 0.0, %v1093
    %v1095 = vpop.f32.mrf.mxu0
    %v1096 = vadd.f32 0.0, %v1095
    %1097 = vmatmul.bf16.gmra.mxu0 %v790
    %v1098 = vpop.f32.mrf.mxu0
    %v1099 = vadd.f32 0.0, %v1098
    %v1100 = vpop.f32.mrf.mxu0
    %v1101 = vadd.f32 0.0, %v1100
    %1102 = vmatmul.bf16.gmra.mxu0 %v793
    %v1103 = vpop.f32.mrf.mxu0
    %v1104 = vadd.f32 0.0, %v1103
    %v1105 = vpop.f32.mrf.mxu0
    %v1106 = vadd.f32 0.0, %v1105
    %1107 = vmatmul.bf16.gmra.mxu0 %v796
    %v1108 = vpop.f32.mrf.mxu0
    %v1109 = vadd.f32 0.0, %v1108
    %v1110 = vpop.f32.mrf.mxu0
    %v1111 = vadd.f32 0.0, %v1110
    %1112 = vmatmul.bf16.gmra.mxu0 %v799
    %v1113 = vpop.f32.mrf.mxu0
    %v1114 = vadd.f32 0.0, %v1113
    %v1115 = vpop.f32.mrf.mxu0
    %v1116 = vadd.f32 0.0, %v1115
    %1117 = vmatmul.bf16.gmra.mxu0 %v802
    %v1118 = vpop.f32.mrf.mxu0
    %v1119 = vadd.f32 0.0, %v1118
    %v1120 = vpop.f32.mrf.mxu0
    %v1121 = vadd.f32 0.0, %v1120
    %1122 = vmatmul.bf16.gmra.mxu0 %v805
    %v1123 = vpop.f32.mrf.mxu0
    %v1124 = vadd.f32 0.0, %v1123
    %v1125 = vpop.f32.mrf.mxu0
    %v1126 = vadd.f32 0.0, %v1125
    %1127 = vmatmul.bf16.gmra.mxu0 %v808
    %v1128 = vpop.f32.mrf.mxu0
    %v1129 = vadd.f32 0.0, %v1128
    %v1130 = vpop.f32.mrf.mxu0
    %v1131 = vadd.f32 0.0, %v1130
    %1132 = vmatmul.bf16.gmra.mxu0 %v811
    %v1133 = vpop.f32.mrf.mxu0
    %v1134 = vadd.f32 0.0, %v1133
    %v1135 = vpop.f32.mrf.mxu0
    %v1136 = vadd.f32 0.0, %v1135
    %1137 = vmatmul.bf16.gmra.mxu0 %v814
    %v1138 = vpop.f32.mrf.mxu0
    %v1139 = vadd.f32 0.0, %v1138
    %v1140 = vpop.f32.mrf.mxu0
    %v1141 = vadd.f32 0.0, %v1140
    %1142 = vmatmul.bf16.gmra.mxu0 %v817
    %v1143 = vpop.f32.mrf.mxu0
    %v1144 = vadd.f32 0.0, %v1143
    %v1145 = vpop.f32.mrf.mxu0
    %v1146 = vadd.f32 0.0, %v1145
    %1147 = vdwg.mxu0
    %v1276 = vunpack.c.l.b16 %v30
    %v1277 = vunpack.c.l.b16 %v31
    %v1278 = vunpack.c.l.b16 %v32
    %v1279 = vunpack.c.l.b16 %v33
    %v1280 = vunpack.c.l.b16 %v34
    %v1281 = vunpack.c.l.b16 %v35
    %v1282 = vunpack.c.l.b16 %v36
    %v1283 = vunpack.c.l.b16 %v37
    %v1284 = vunpack.c.l.b16 %v38
    %v1285 = vunpack.c.l.b16 %v39
    %v1286 = vunpack.c.l.b16 %v40
    %v1287 = vunpack.c.l.b16 %v41
    %v1288 = vunpack.c.l.b16 %v42
    %v1289 = vunpack.c.l.b16 %v43
    %v1290 = vunpack.c.l.b16 %v44
    %v1291 = vunpack.c.l.b16 %v45
    %v1292 = vunpack.c.l.b16 %v46
    %v1293 = vunpack.c.l.b16 %v47
    %v1294 = vunpack.c.l.b16 %v48
    %v1295 = vunpack.c.l.b16 %v49
    %v1296 = vunpack.c.l.b16 %v50
    %v1297 = vunpack.c.l.b16 %v51
    %v1298 = vunpack.c.l.b16 %v52
    %v1299 = vunpack.c.l.b16 %v53
    %v1300 = vunpack.c.l.b16 %v54
    %v1301 = vunpack.c.l.b16 %v55
    %v1302 = vunpack.c.l.b16 %v56
    %v1303 = vunpack.c.l.b16 %v57
    %v1304 = vunpack.c.l.b16 %v58
    %v1305 = vunpack.c.l.b16 %v59
    %v1306 = vunpack.c.l.b16 %v60
    %v1307 = vunpack.c.l.b16 %v61
    %v1308 = vunpack.c.l.b16 %v62
    %v1309 = vunpack.c.l.b16 %v63
    %v1310 = vunpack.c.l.b16 %v64
    %v1311 = vunpack.c.l.b16 %v65
    %v1312 = vunpack.c.l.b16 %v66
    %v1313 = vunpack.c.l.b16 %v67
    %v1314 = vunpack.c.l.b16 %v68
    %v1315 = vunpack.c.l.b16 %v69
    %v1316 = vunpack.c.l.b16 %v70
    %v1317 = vunpack.c.l.b16 %v71
    %v1318 = vunpack.c.l.b16 %v72
    %v1319 = vunpack.c.l.b16 %v73
    %v1320 = vunpack.c.l.b16 %v74
    %v1321 = vunpack.c.l.b16 %v75
    %v1322 = vunpack.c.l.b16 %v76
    %v1323 = vunpack.c.l.b16 %v77
    %v1324 = vunpack.c.l.b16 %v78
    %v1325 = vunpack.c.l.b16 %v79
    %v1326 = vunpack.c.l.b16 %v80
    %v1327 = vunpack.c.l.b16 %v81
    %v1328 = vunpack.c.l.b16 %v82
    %v1329 = vunpack.c.l.b16 %v83
    %v1330 = vunpack.c.l.b16 %v84
    %v1331 = vunpack.c.l.b16 %v85
    %v1332 = vunpack.c.l.b16 %v86
    %v1333 = vunpack.c.l.b16 %v87
    %v1334 = vunpack.c.l.b16 %v88
    %v1335 = vunpack.c.l.b16 %v89
    %v1336 = vunpack.c.l.b16 %v90
    %v1337 = vunpack.c.l.b16 %v91
    %v1338 = vunpack.c.l.b16 %v92
    %v1339 = vunpack.c.l.b16 %v93
    %v1340 = vunpack.c.l.b16 %v94
    %v1341 = vunpack.c.l.b16 %v95
    %v1342 = vunpack.c.l.b16 %v96
    %v1343 = vunpack.c.l.b16 %v97
    %v1344 = vunpack.c.l.b16 %v98
    %v1345 = vunpack.c.l.b16 %v99
    %v1346 = vunpack.c.l.b16 %v100
    %v1347 = vunpack.c.l.b16 %v101
    %v1348 = vunpack.c.l.b16 %v102
    %v1349 = vunpack.c.l.b16 %v103
    %v1350 = vunpack.c.l.b16 %v104
    %v1351 = vunpack.c.l.b16 %v105
    %v1352 = vunpack.c.l.b16 %v106
    %v1353 = vunpack.c.l.b16 %v107
    %v1354 = vunpack.c.l.b16 %v108
    %v1355 = vunpack.c.l.b16 %v109
    %v1356 = vunpack.c.l.b16 %v110
    %v1357 = vunpack.c.l.b16 %v111
    %v1358 = vunpack.c.l.b16 %v112
    %v1359 = vunpack.c.l.b16 %v113
    %v1360 = vunpack.c.l.b16 %v114
    %v1361 = vunpack.c.l.b16 %v115
    %v1362 = vunpack.c.l.b16 %v116
    %v1363 = vunpack.c.l.b16 %v117
    %v1364 = vunpack.c.l.b16 %v118
    %v1365 = vunpack.c.l.b16 %v119
    %v1366 = vunpack.c.l.b16 %v120
    %v1367 = vunpack.c.l.b16 %v121
    %v1368 = vunpack.c.l.b16 %v122
    %v1369 = vunpack.c.l.b16 %v123
    %v1370 = vunpack.c.l.b16 %v124
    %v1371 = vunpack.c.l.b16 %v125
    %v1372 = vunpack.c.l.b16 %v126
    %v1373 = vunpack.c.l.b16 %v127
    %v1374 = vunpack.c.l.b16 %v128
    %v1375 = vunpack.c.l.b16 %v129
    %v1376 = vunpack.c.l.b16 %v130
    %v1377 = vunpack.c.l.b16 %v131
    %v1378 = vunpack.c.l.b16 %v132
    %v1379 = vunpack.c.l.b16 %v133
    %v1380 = vunpack.c.l.b16 %v134
    %v1381 = vunpack.c.l.b16 %v135
    %v1382 = vunpack.c.l.b16 %v136
    %v1383 = vunpack.c.l.b16 %v137
    %v1384 = vunpack.c.l.b16 %v138
    %v1385 = vunpack.c.l.b16 %v139
    %v1386 = vunpack.c.l.b16 %v140
    %v1387 = vunpack.c.l.b16 %v141
    %v1388 = vunpack.c.l.b16 %v142
    %v1389 = vunpack.c.l.b16 %v143
    %v1390 = vunpack.c.l.b16 %v144
    %v1391 = vunpack.c.l.b16 %v145
    %v1392 = vunpack.c.l.b16 %v146
    %v1393 = vunpack.c.l.b16 %v147
    %v1394 = vunpack.c.l.b16 %v148
    %v1395 = vunpack.c.l.b16 %v149
    %v1396 = vunpack.c.l.b16 %v150
    %v1397 = vunpack.c.l.b16 %v151
    %v1398 = vunpack.c.l.b16 %v152
    %v1399 = vunpack.c.l.b16 %v153
    %v1400 = vunpack.c.l.b16 %v154
    %v1401 = vunpack.c.l.b16 %v155
    %v1402 = vunpack.c.l.b16 %v156
    %v1403 = vunpack.c.l.b16 %v157
    %v1404 = vpack.c.b16 %v1277, %v1276
    %v1405 = vpack.c.b16 %v1279, %v1278
    %v1406 = vpack.c.b16 %v1281, %v1280
    %v1407 = vpack.c.b16 %v1283, %v1282
    %v1408 = vpack.c.b16 %v1285, %v1284
    %v1409 = vpack.c.b16 %v1287, %v1286
    %v1410 = vpack.c.b16 %v1289, %v1288
    %v1411 = vpack.c.b16 %v1291, %v1290
    %v1412 = vpack.c.b16 %v1293, %v1292
    %v1413 = vpack.c.b16 %v1295, %v1294
    %v1414 = vpack.c.b16 %v1297, %v1296
    %v1415 = vpack.c.b16 %v1299, %v1298
    %v1416 = vpack.c.b16 %v1301, %v1300
    %v1417 = vpack.c.b16 %v1303, %v1302
    %v1418 = vpack.c.b16 %v1305, %v1304
    %v1419 = vpack.c.b16 %v1307, %v1306
    %v1420 = vpack.c.b16 %v1309, %v1308
    %v1421 = vpack.c.b16 %v1311, %v1310
    %v1422 = vpack.c.b16 %v1313, %v1312
    %v1423 = vpack.c.b16 %v1315, %v1314
    %v1424 = vpack.c.b16 %v1317, %v1316
    %v1425 = vpack.c.b16 %v1319, %v1318
    %v1426 = vpack.c.b16 %v1321, %v1320
    %v1427 = vpack.c.b16 %v1323, %v1322
    %v1428 = vpack.c.b16 %v1325, %v1324
    %v1429 = vpack.c.b16 %v1327, %v1326
    %v1430 = vpack.c.b16 %v1329, %v1328
    %v1431 = vpack.c.b16 %v1331, %v1330
    %v1432 = vpack.c.b16 %v1333, %v1332
    %v1433 = vpack.c.b16 %v1335, %v1334
    %v1434 = vpack.c.b16 %v1337, %v1336
    %v1435 = vpack.c.b16 %v1339, %v1338
    %v1436 = vpack.c.b16 %v1341, %v1340
    %v1437 = vpack.c.b16 %v1343, %v1342
    %v1438 = vpack.c.b16 %v1345, %v1344
    %v1439 = vpack.c.b16 %v1347, %v1346
    %v1440 = vpack.c.b16 %v1349, %v1348
    %v1441 = vpack.c.b16 %v1351, %v1350
    %v1442 = vpack.c.b16 %v1353, %v1352
    %v1443 = vpack.c.b16 %v1355, %v1354
    %v1444 = vpack.c.b16 %v1357, %v1356
    %v1445 = vpack.c.b16 %v1359, %v1358
    %v1446 = vpack.c.b16 %v1361, %v1360
    %v1447 = vpack.c.b16 %v1363, %v1362
    %v1448 = vpack.c.b16 %v1365, %v1364
    %v1449 = vpack.c.b16 %v1367, %v1366
    %v1450 = vpack.c.b16 %v1369, %v1368
    %v1451 = vpack.c.b16 %v1371, %v1370
    %v1452 = vpack.c.b16 %v1373, %v1372
    %v1453 = vpack.c.b16 %v1375, %v1374
    %v1454 = vpack.c.b16 %v1377, %v1376
    %v1455 = vpack.c.b16 %v1379, %v1378
    %v1456 = vpack.c.b16 %v1381, %v1380
    %v1457 = vpack.c.b16 %v1383, %v1382
    %v1458 = vpack.c.b16 %v1385, %v1384
    %v1459 = vpack.c.b16 %v1387, %v1386
    %v1460 = vpack.c.b16 %v1389, %v1388
    %v1461 = vpack.c.b16 %v1391, %v1390
    %v1462 = vpack.c.b16 %v1393, %v1392
    %v1463 = vpack.c.b16 %v1395, %v1394
    %v1464 = vpack.c.b16 %v1397, %v1396
    %v1465 = vpack.c.b16 %v1399, %v1398
    %v1466 = vpack.c.b16 %v1401, %v1400
    %v1467 = vpack.c.b16 %v1403, %v1402
    %v1472 = vunpack.c.l.b16 %v158
    %v1473 = vunpack.c.l.b16 %v159
    %v1474 = vunpack.c.l.b16 %v160
    %v1475 = vunpack.c.l.b16 %v161
    %v1476 = vpack.c.b16 %v1473, %v1472
    %v1477 = vpack.c.b16 %v1475, %v1474
    %v1481 = vsel %vm626, %v1404, 0
    %v1484 = vsel %vm626, %v1405, 0
    %v1487 = vsel %vm626, %v1406, 0
    %v1490 = vsel %vm626, %v1407, 0
    %v1493 = vsel %vm626, %v1408, 0
    %v1496 = vsel %vm626, %v1409, 0
    %v1499 = vsel %vm626, %v1410, 0
    %v1502 = vsel %vm626, %v1411, 0
    %v1505 = vsel %vm626, %v1412, 0
    %v1508 = vsel %vm626, %v1413, 0
    %v1511 = vsel %vm626, %v1414, 0
    %v1514 = vsel %vm626, %v1415, 0
    %v1517 = vsel %vm626, %v1416, 0
    %v1520 = vsel %vm626, %v1417, 0
    %v1523 = vsel %vm626, %v1418, 0
    %v1526 = vsel %vm626, %v1419, 0
    %v1529 = vsel %vm626, %v1420, 0
    %v1532 = vsel %vm626, %v1421, 0
    %v1535 = vsel %vm626, %v1422, 0
    %v1538 = vsel %vm626, %v1423, 0
    %v1541 = vsel %vm626, %v1424, 0
    %v1544 = vsel %vm626, %v1425, 0
    %v1547 = vsel %vm626, %v1426, 0
    %v1550 = vsel %vm626, %v1427, 0
    %v1553 = vsel %vm626, %v1428, 0
    %v1556 = vsel %vm626, %v1429, 0
    %v1559 = vsel %vm626, %v1430, 0
    %v1562 = vsel %vm626, %v1431, 0
    %v1565 = vsel %vm626, %v1432, 0
    %v1568 = vsel %vm626, %v1433, 0
    %v1571 = vsel %vm626, %v1434, 0
    %v1574 = vsel %vm626, %v1435, 0
    %v1577 = vsel %vm626, %v1436, 0
    %v1580 = vsel %vm626, %v1437, 0
    %v1583 = vsel %vm626, %v1438, 0
    %v1586 = vsel %vm626, %v1439, 0
    %v1589 = vsel %vm626, %v1440, 0
    %v1592 = vsel %vm626, %v1441, 0
    %v1595 = vsel %vm626, %v1442, 0
    %v1598 = vsel %vm626, %v1443, 0
    %v1601 = vsel %vm626, %v1444, 0
    %v1604 = vsel %vm626, %v1445, 0
    %v1607 = vsel %vm626, %v1446, 0
    %v1610 = vsel %vm626, %v1447, 0
    %v1613 = vsel %vm626, %v1448, 0
    %v1616 = vsel %vm626, %v1449, 0
    %v1619 = vsel %vm626, %v1450, 0
    %v1622 = vsel %vm626, %v1451, 0
    %v1625 = vsel %vm626, %v1452, 0
    %v1628 = vsel %vm626, %v1453, 0
    %v1631 = vsel %vm626, %v1454, 0
    %v1634 = vsel %vm626, %v1455, 0
    %v1637 = vsel %vm626, %v1456, 0
    %v1640 = vsel %vm626, %v1457, 0
    %v1643 = vsel %vm626, %v1458, 0
    %v1646 = vsel %vm626, %v1459, 0
    %v1649 = vsel %vm626, %v1460, 0
    %v1652 = vsel %vm626, %v1461, 0
    %v1655 = vsel %vm626, %v1462, 0
    %v1658 = vsel %vm626, %v1463, 0
    %v1661 = vsel %vm626, %v1464, 0
    %v1664 = vsel %vm626, %v1465, 0
    %v1667 = vsel %vm626, %v1466, 0
    %v1670 = vsel %vm626, %v1467, 0
    %1672 = vmatpush.bf16.msra.mxu0 0
    %1673 = vmatpush.bf16.msra.mxu0 0
    %1674 = vmatpush.bf16.msra.mxu0 0
    %1675 = vmatpush.bf16.msra.mxu0 0
    %1676 = vmatpush.bf16.msra.mxu0 0
    %1677 = vmatpush.bf16.msra.mxu0 0
    %1678 = vmatpush.bf16.msra.mxu0 %v1477
    %1679 = vmatpush.bf16.msra.mxu0 %v1476
    %1680 = vmatmul.bf16.gmra.mxu0 %v1481
    %v1681 = vpop.f32.mrf.mxu0
    %v1682 = vadd.f32 %v829, %v1681
    %v1683 = vpop.f32.mrf.mxu0
    %v1684 = vadd.f32 %v831, %v1683
    %1685 = vmatmul.bf16.gmra.mxu0 %v1484
    %v1686 = vpop.f32.mrf.mxu0
    %v1687 = vadd.f32 %v834, %v1686
    %v1688 = vpop.f32.mrf.mxu0
    %v1689 = vadd.f32 %v836, %v1688
    %1690 = vmatmul.bf16.gmra.mxu0 %v1487
    %v1691 = vpop.f32.mrf.mxu0
    %v1692 = vadd.f32 %v839, %v1691
    %v1693 = vpop.f32.mrf.mxu0
    %v1694 = vadd.f32 %v841, %v1693
    %1695 = vmatmul.bf16.gmra.mxu0 %v1490
    %v1696 = vpop.f32.mrf.mxu0
    %v1697 = vadd.f32 %v844, %v1696
    %v1698 = vpop.f32.mrf.mxu0
    %v1699 = vadd.f32 %v846, %v1698
    %1700 = vmatmul.bf16.gmra.mxu0 %v1493
    %v1701 = vpop.f32.mrf.mxu0
    %v1702 = vadd.f32 %v849, %v1701
    %v1703 = vpop.f32.mrf.mxu0
    %v1704 = vadd.f32 %v851, %v1703
    %1705 = vmatmul.bf16.gmra.mxu0 %v1496
    %v1706 = vpop.f32.mrf.mxu0
    %v1707 = vadd.f32 %v854, %v1706
    %v1708 = vpop.f32.mrf.mxu0
    %v1709 = vadd.f32 %v856, %v1708
    %1710 = vmatmul.bf16.gmra.mxu0 %v1499
    %v1711 = vpop.f32.mrf.mxu0
    %v1712 = vadd.f32 %v859, %v1711
    %v1713 = vpop.f32.mrf.mxu0
    %v1714 = vadd.f32 %v861, %v1713
    %1715 = vmatmul.bf16.gmra.mxu0 %v1502
    %v1716 = vpop.f32.mrf.mxu0
    %v1717 = vadd.f32 %v864, %v1716
    %v1718 = vpop.f32.mrf.mxu0
    %v1719 = vadd.f32 %v866, %v1718
    %1720 = vmatmul.bf16.gmra.mxu0 %v1505
    %v1721 = vpop.f32.mrf.mxu0
    %v1722 = vadd.f32 %v869, %v1721
    %v1723 = vpop.f32.mrf.mxu0
    %v1724 = vadd.f32 %v871, %v1723
    %1725 = vmatmul.bf16.gmra.mxu0 %v1508
    %v1726 = vpop.f32.mrf.mxu0
    %v1727 = vadd.f32 %v874, %v1726
    %v1728 = vpop.f32.mrf.mxu0
    %v1729 = vadd.f32 %v876, %v1728
    %1730 = vmatmul.bf16.gmra.mxu0 %v1511
    %v1731 = vpop.f32.mrf.mxu0
    %v1732 = vadd.f32 %v879, %v1731
    %v1733 = vpop.f32.mrf.mxu0
    %v1734 = vadd.f32 %v881, %v1733
    %1735 = vmatmul.bf16.gmra.mxu0 %v1514
    %v1736 = vpop.f32.mrf.mxu0
    %v1737 = vadd.f32 %v884, %v1736
    %v1738 = vpop.f32.mrf.mxu0
    %v1739 = vadd.f32 %v886, %v1738
    %1740 = vmatmul.bf16.gmra.mxu0 %v1517
    %v1741 = vpop.f32.mrf.mxu0
    %v1742 = vadd.f32 %v889, %v1741
    %v1743 = vpop.f32.mrf.mxu0
    %v1744 = vadd.f32 %v891, %v1743
    %1745 = vmatmul.bf16.gmra.mxu0 %v1520
    %v1746 = vpop.f32.mrf.mxu0
    %v1747 = vadd.f32 %v894, %v1746
    %v1748 = vpop.f32.mrf.mxu0
    %v1749 = vadd.f32 %v896, %v1748
    %1750 = vmatmul.bf16.gmra.mxu0 %v1523
    %v1751 = vpop.f32.mrf.mxu0
    %v1752 = vadd.f32 %v899, %v1751
    %v1753 = vpop.f32.mrf.mxu0
    %v1754 = vadd.f32 %v901, %v1753
    %1755 = vmatmul.bf16.gmra.mxu0 %v1526
    %v1756 = vpop.f32.mrf.mxu0
    %v1757 = vadd.f32 %v904, %v1756
    %v1758 = vpop.f32.mrf.mxu0
    %v1759 = vadd.f32 %v906, %v1758
    %1760 = vmatmul.bf16.gmra.mxu0 %v1529
    %v1761 = vpop.f32.mrf.mxu0
    %v1762 = vadd.f32 %v909, %v1761
    %v1763 = vpop.f32.mrf.mxu0
    %v1764 = vadd.f32 %v911, %v1763
    %1765 = vmatmul.bf16.gmra.mxu0 %v1532
    %v1766 = vpop.f32.mrf.mxu0
    %v1767 = vadd.f32 %v914, %v1766
    %v1768 = vpop.f32.mrf.mxu0
    %v1769 = vadd.f32 %v916, %v1768
    %1770 = vmatmul.bf16.gmra.mxu0 %v1535
    %v1771 = vpop.f32.mrf.mxu0
    %v1772 = vadd.f32 %v919, %v1771
    %v1773 = vpop.f32.mrf.mxu0
    %v1774 = vadd.f32 %v921, %v1773
    %1775 = vmatmul.bf16.gmra.mxu0 %v1538
    %v1776 = vpop.f32.mrf.mxu0
    %v1777 = vadd.f32 %v924, %v1776
    %v1778 = vpop.f32.mrf.mxu0
    %v1779 = vadd.f32 %v926, %v1778
    %1780 = vmatmul.bf16.gmra.mxu0 %v1541
    %v1781 = vpop.f32.mrf.mxu0
    %v1782 = vadd.f32 %v929, %v1781
    %v1783 = vpop.f32.mrf.mxu0
    %v1784 = vadd.f32 %v931, %v1783
    %1785 = vmatmul.bf16.gmra.mxu0 %v1544
    %v1786 = vpop.f32.mrf.mxu0
    %v1787 = vadd.f32 %v934, %v1786
    %v1788 = vpop.f32.mrf.mxu0
    %v1789 = vadd.f32 %v936, %v1788
    %1790 = vmatmul.bf16.gmra.mxu0 %v1547
    %v1791 = vpop.f32.mrf.mxu0
    %v1792 = vadd.f32 %v939, %v1791
    %v1793 = vpop.f32.mrf.mxu0
    %v1794 = vadd.f32 %v941, %v1793
    %1795 = vmatmul.bf16.gmra.mxu0 %v1550
    %v1796 = vpop.f32.mrf.mxu0
    %v1797 = vadd.f32 %v944, %v1796
    %v1798 = vpop.f32.mrf.mxu0
    %v1799 = vadd.f32 %v946, %v1798
    %1800 = vmatmul.bf16.gmra.mxu0 %v1553
    %v1801 = vpop.f32.mrf.mxu0
    %v1802 = vadd.f32 %v949, %v1801
    %v1803 = vpop.f32.mrf.mxu0
    %v1804 = vadd.f32 %v951, %v1803
    %1805 = vmatmul.bf16.gmra.mxu0 %v1556
    %v1806 = vpop.f32.mrf.mxu0
    %v1807 = vadd.f32 %v954, %v1806
    %v1808 = vpop.f32.mrf.mxu0
    %v1809 = vadd.f32 %v956, %v1808
    %1810 = vmatmul.bf16.gmra.mxu0 %v1559
    %v1811 = vpop.f32.mrf.mxu0
    %v1812 = vadd.f32 %v959, %v1811
    %v1813 = vpop.f32.mrf.mxu0
    %v1814 = vadd.f32 %v961, %v1813
    %1815 = vmatmul.bf16.gmra.mxu0 %v1562
    %v1816 = vpop.f32.mrf.mxu0
    %v1817 = vadd.f32 %v964, %v1816
    %v1818 = vpop.f32.mrf.mxu0
    %v1819 = vadd.f32 %v966, %v1818
    %1820 = vmatmul.bf16.gmra.mxu0 %v1565
    %v1821 = vpop.f32.mrf.mxu0
    %v1822 = vadd.f32 %v969, %v1821
    %v1823 = vpop.f32.mrf.mxu0
    %v1824 = vadd.f32 %v971, %v1823
    %1825 = vmatmul.bf16.gmra.mxu0 %v1568
    %v1826 = vpop.f32.mrf.mxu0
    %v1827 = vadd.f32 %v974, %v1826
    %v1828 = vpop.f32.mrf.mxu0
    %v1829 = vadd.f32 %v976, %v1828
    %1830 = vmatmul.bf16.gmra.mxu0 %v1571
    %v1831 = vpop.f32.mrf.mxu0
    %v1832 = vadd.f32 %v979, %v1831
    %v1833 = vpop.f32.mrf.mxu0
    %v1834 = vadd.f32 %v981, %v1833
    %1835 = vmatmul.bf16.gmra.mxu0 %v1574
    %v1836 = vpop.f32.mrf.mxu0
    %v1837 = vadd.f32 %v984, %v1836
    %v1838 = vpop.f32.mrf.mxu0
    %v1839 = vadd.f32 %v986, %v1838
    %1840 = vmatmul.bf16.gmra.mxu0 %v1577
    %v1841 = vpop.f32.mrf.mxu0
    %v1842 = vadd.f32 %v989, %v1841
    %v1843 = vpop.f32.mrf.mxu0
    %v1844 = vadd.f32 %v991, %v1843
    %1845 = vmatmul.bf16.gmra.mxu0 %v1580
    %v1846 = vpop.f32.mrf.mxu0
    %v1847 = vadd.f32 %v994, %v1846
    %v1848 = vpop.f32.mrf.mxu0
    %v1849 = vadd.f32 %v996, %v1848
    %1850 = vmatmul.bf16.gmra.mxu0 %v1583
    %v1851 = vpop.f32.mrf.mxu0
    %v1852 = vadd.f32 %v999, %v1851
    %v1853 = vpop.f32.mrf.mxu0
    %v1854 = vadd.f32 %v1001, %v1853
    %1855 = vmatmul.bf16.gmra.mxu0 %v1586
    %v1856 = vpop.f32.mrf.mxu0
    %v1857 = vadd.f32 %v1004, %v1856
    %v1858 = vpop.f32.mrf.mxu0
    %v1859 = vadd.f32 %v1006, %v1858
    %1860 = vmatmul.bf16.gmra.mxu0 %v1589
    %v1861 = vpop.f32.mrf.mxu0
    %v1862 = vadd.f32 %v1009, %v1861
    %v1863 = vpop.f32.mrf.mxu0
    %v1864 = vadd.f32 %v1011, %v1863
    %1865 = vmatmul.bf16.gmra.mxu0 %v1592
    %v1866 = vpop.f32.mrf.mxu0
    %v1867 = vadd.f32 %v1014, %v1866
    %v1868 = vpop.f32.mrf.mxu0
    %v1869 = vadd.f32 %v1016, %v1868
    %1870 = vmatmul.bf16.gmra.mxu0 %v1595
    %v1871 = vpop.f32.mrf.mxu0
    %v1872 = vadd.f32 %v1019, %v1871
    %v1873 = vpop.f32.mrf.mxu0
    %v1874 = vadd.f32 %v1021, %v1873
    %1875 = vmatmul.bf16.gmra.mxu0 %v1598
    %v1876 = vpop.f32.mrf.mxu0
    %v1877 = vadd.f32 %v1024, %v1876
    %v1878 = vpop.f32.mrf.mxu0
    %v1879 = vadd.f32 %v1026, %v1878
    %1880 = vmatmul.bf16.gmra.mxu0 %v1601
    %v1881 = vpop.f32.mrf.mxu0
    %v1882 = vadd.f32 %v1029, %v1881
    %v1883 = vpop.f32.mrf.mxu0
    %v1884 = vadd.f32 %v1031, %v1883
    %1885 = vmatmul.bf16.gmra.mxu0 %v1604
    %v1886 = vpop.f32.mrf.mxu0
    %v1887 = vadd.f32 %v1034, %v1886
    %v1888 = vpop.f32.mrf.mxu0
    %v1889 = vadd.f32 %v1036, %v1888
    %1890 = vmatmul.bf16.gmra.mxu0 %v1607
    %v1891 = vpop.f32.mrf.mxu0
    %v1892 = vadd.f32 %v1039, %v1891
    %v1893 = vpop.f32.mrf.mxu0
    %v1894 = vadd.f32 %v1041, %v1893
    %1895 = vmatmul.bf16.gmra.mxu0 %v1610
    %v1896 = vpop.f32.mrf.mxu0
    %v1897 = vadd.f32 %v1044, %v1896
    %v1898 = vpop.f32.mrf.mxu0
    %v1899 = vadd.f32 %v1046, %v1898
    %1900 = vmatmul.bf16.gmra.mxu0 %v1613
    %v1901 = vpop.f32.mrf.mxu0
    %v1902 = vadd.f32 %v1049, %v1901
    %v1903 = vpop.f32.mrf.mxu0
    %v1904 = vadd.f32 %v1051, %v1903
    %1905 = vmatmul.bf16.gmra.mxu0 %v1616
    %v1906 = vpop.f32.mrf.mxu0
    %v1907 = vadd.f32 %v1054, %v1906
    %v1908 = vpop.f32.mrf.mxu0
    %v1909 = vadd.f32 %v1056, %v1908
    %1910 = vmatmul.bf16.gmra.mxu0 %v1619
    %v1911 = vpop.f32.mrf.mxu0
    %v1912 = vadd.f32 %v1059, %v1911
    %v1913 = vpop.f32.mrf.mxu0
    %v1914 = vadd.f32 %v1061, %v1913
    %1915 = vmatmul.bf16.gmra.mxu0 %v1622
    %v1916 = vpop.f32.mrf.mxu0
    %v1917 = vadd.f32 %v1064, %v1916
    %v1918 = vpop.f32.mrf.mxu0
    %v1919 = vadd.f32 %v1066, %v1918
    %1920 = vmatmul.bf16.gmra.mxu0 %v1625
    %v1921 = vpop.f32.mrf.mxu0
    %v1922 = vadd.f32 %v1069, %v1921
    %v1923 = vpop.f32.mrf.mxu0
    %v1924 = vadd.f32 %v1071, %v1923
    %1925 = vmatmul.bf16.gmra.mxu0 %v1628
    %v1926 = vpop.f32.mrf.mxu0
    %v1927 = vadd.f32 %v1074, %v1926
    %v1928 = vpop.f32.mrf.mxu0
    %v1929 = vadd.f32 %v1076, %v1928
    %1930 = vmatmul.bf16.gmra.mxu0 %v1631
    %v1931 = vpop.f32.mrf.mxu0
    %v1932 = vadd.f32 %v1079, %v1931
    %v1933 = vpop.f32.mrf.mxu0
    %v1934 = vadd.f32 %v1081, %v1933
    %1935 = vmatmul.bf16.gmra.mxu0 %v1634
    %v1936 = vpop.f32.mrf.mxu0
    %v1937 = vadd.f32 %v1084, %v1936
    %v1938 = vpop.f32.mrf.mxu0
    %v1939 = vadd.f32 %v1086, %v1938
    %1940 = vmatmul.bf16.gmra.mxu0 %v1637
    %v1941 = vpop.f32.mrf.mxu0
    %v1942 = vadd.f32 %v1089, %v1941
    %v1943 = vpop.f32.mrf.mxu0
    %v1944 = vadd.f32 %v1091, %v1943
    %1945 = vmatmul.bf16.gmra.mxu0 %v1640
    %v1946 = vpop.f32.mrf.mxu0
    %v1947 = vadd.f32 %v1094, %v1946
    %v1948 = vpop.f32.mrf.mxu0
    %v1949 = vadd.f32 %v1096, %v1948
    %1950 = vmatmul.bf16.gmra.mxu0 %v1643
    %v1951 = vpop.f32.mrf.mxu0
    %v1952 = vadd.f32 %v1099, %v1951
    %v1953 = vpop.f32.mrf.mxu0
    %v1954 = vadd.f32 %v1101, %v1953
    %1955 = vmatmul.bf16.gmra.mxu0 %v1646
    %v1956 = vpop.f32.mrf.mxu0
    %v1957 = vadd.f32 %v1104, %v1956
    %v1958 = vpop.f32.mrf.mxu0
    %v1959 = vadd.f32 %v1106, %v1958
    %1960 = vmatmul.bf16.gmra.mxu0 %v1649
    %v1961 = vpop.f32.mrf.mxu0
    %v1962 = vadd.f32 %v1109, %v1961
    %v1963 = vpop.f32.mrf.mxu0
    %v1964 = vadd.f32 %v1111, %v1963
    %1965 = vmatmul.bf16.gmra.mxu0 %v1652
    %v1966 = vpop.f32.mrf.mxu0
    %v1967 = vadd.f32 %v1114, %v1966
    %v1968 = vpop.f32.mrf.mxu0
    %v1969 = vadd.f32 %v1116, %v1968
    %1970 = vmatmul.bf16.gmra.mxu0 %v1655
    %v1971 = vpop.f32.mrf.mxu0
    %v1972 = vadd.f32 %v1119, %v1971
    %v1973 = vpop.f32.mrf.mxu0
    %v1974 = vadd.f32 %v1121, %v1973
    %1975 = vmatmul.bf16.gmra.mxu0 %v1658
    %v1976 = vpop.f32.mrf.mxu0
    %v1977 = vadd.f32 %v1124, %v1976
    %v1978 = vpop.f32.mrf.mxu0
    %v1979 = vadd.f32 %v1126, %v1978
    %1980 = vmatmul.bf16.gmra.mxu0 %v1661
    %v1981 = vpop.f32.mrf.mxu0
    %v1982 = vadd.f32 %v1129, %v1981
    %v1983 = vpop.f32.mrf.mxu0
    %v1984 = vadd.f32 %v1131, %v1983
    %1985 = vmatmul.bf16.gmra.mxu0 %v1664
    %v1986 = vpop.f32.mrf.mxu0
    %v1987 = vadd.f32 %v1134, %v1986
    %v1988 = vpop.f32.mrf.mxu0
    %v1989 = vadd.f32 %v1136, %v1988
    %1990 = vmatmul.bf16.gmra.mxu0 %v1667
    %v1991 = vpop.f32.mrf.mxu0
    %v1992 = vadd.f32 %v1139, %v1991
    %v1993 = vpop.f32.mrf.mxu0
    %v1994 = vadd.f32 %v1141, %v1993
    %1995 = vmatmul.bf16.gmra.mxu0 %v1670
    %v1996 = vpop.f32.mrf.mxu0
    %v1997 = vadd.f32 %v1144, %v1996
    %v1998 = vpop.f32.mrf.mxu0
    %v1999 = vadd.f32 %v1146, %v1998
    %2000 = vdwg.mxu0
    %v2001 = vld [vmem:[%s4] sm:$0x1]
    %v2003 = vperm.slane %v2001, 0
    %v2005 = vadd.f32 %v1682, %v2003
    %v2006 = vadd.f32 %v1684, %v2003
    %v2007 = vadd.f32 %v1687, %v2003
    %v2008 = vadd.f32 %v1689, %v2003
    %v2009 = vadd.f32 %v1692, %v2003
    %v2010 = vadd.f32 %v1694, %v2003
    %v2011 = vadd.f32 %v1697, %v2003
    %v2012 = vadd.f32 %v1699, %v2003
    %v2013 = vadd.f32 %v1702, %v2003
    %v2014 = vadd.f32 %v1704, %v2003
    %v2015 = vadd.f32 %v1707, %v2003
    %v2016 = vadd.f32 %v1709, %v2003
    %v2017 = vadd.f32 %v1712, %v2003
    %v2018 = vadd.f32 %v1714, %v2003
    %v2019 = vadd.f32 %v1717, %v2003
    %v2020 = vadd.f32 %v1719, %v2003
    %v2021 = vadd.f32 %v1722, %v2003
    %v2022 = vadd.f32 %v1724, %v2003
    %v2023 = vadd.f32 %v1727, %v2003
    %v2024 = vadd.f32 %v1729, %v2003
    %v2025 = vadd.f32 %v1732, %v2003
    %v2026 = vadd.f32 %v1734, %v2003
    %v2027 = vadd.f32 %v1737, %v2003
    %v2028 = vadd.f32 %v1739, %v2003
    %v2029 = vadd.f32 %v1742, %v2003
    %v2030 = vadd.f32 %v1744, %v2003
    %v2031 = vadd.f32 %v1747, %v2003
    %v2032 = vadd.f32 %v1749, %v2003
    %v2033 = vadd.f32 %v1752, %v2003
    %v2034 = vadd.f32 %v1754, %v2003
    %v2035 = vadd.f32 %v1757, %v2003
    %v2036 = vadd.f32 %v1759, %v2003
    %v2037 = vadd.f32 %v1762, %v2003
    %v2038 = vadd.f32 %v1764, %v2003
    %v2039 = vadd.f32 %v1767, %v2003
    %v2040 = vadd.f32 %v1769, %v2003
    %v2041 = vadd.f32 %v1772, %v2003
    %v2042 = vadd.f32 %v1774, %v2003
    %v2043 = vadd.f32 %v1777, %v2003
    %v2044 = vadd.f32 %v1779, %v2003
    %v2045 = vadd.f32 %v1782, %v2003
    %v2046 = vadd.f32 %v1784, %v2003
    %v2047 = vadd.f32 %v1787, %v2003
    %v2048 = vadd.f32 %v1789, %v2003
    %v2049 = vadd.f32 %v1792, %v2003
    %v2050 = vadd.f32 %v1794, %v2003
    %v2051 = vadd.f32 %v1797, %v2003
    %v2052 = vadd.f32 %v1799, %v2003
    %v2053 = vadd.f32 %v1802, %v2003
    %v2054 = vadd.f32 %v1804, %v2003
    %v2055 = vadd.f32 %v1807, %v2003
    %v2056 = vadd.f32 %v1809, %v2003
    %v2057 = vadd.f32 %v1812, %v2003
    %v2058 = vadd.f32 %v1814, %v2003
    %v2059 = vadd.f32 %v1817, %v2003
    %v2060 = vadd.f32 %v1819, %v2003
    %v2061 = vadd.f32 %v1822, %v2003
    %v2062 = vadd.f32 %v1824, %v2003
    %v2063 = vadd.f32 %v1827, %v2003
    %v2064 = vadd.f32 %v1829, %v2003
    %v2065 = vadd.f32 %v1832, %v2003
    %v2066 = vadd.f32 %v1834, %v2003
    %v2067 = vadd.f32 %v1837, %v2003
    %v2068 = vadd.f32 %v1839, %v2003
    %v2069 = vadd.f32 %v1842, %v2003
    %v2070 = vadd.f32 %v1844, %v2003
    %v2071 = vadd.f32 %v1847, %v2003
    %v2072 = vadd.f32 %v1849, %v2003
    %v2073 = vadd.f32 %v1852, %v2003
    %v2074 = vadd.f32 %v1854, %v2003
    %v2075 = vadd.f32 %v1857, %v2003
    %v2076 = vadd.f32 %v1859, %v2003
    %v2077 = vadd.f32 %v1862, %v2003
    %v2078 = vadd.f32 %v1864, %v2003
    %v2079 = vadd.f32 %v1867, %v2003
    %v2080 = vadd.f32 %v1869, %v2003
    %v2081 = vadd.f32 %v1872, %v2003
    %v2082 = vadd.f32 %v1874, %v2003
    %v2083 = vadd.f32 %v1877, %v2003
    %v2084 = vadd.f32 %v1879, %v2003
    %v2085 = vadd.f32 %v1882, %v2003
    %v2086 = vadd.f32 %v1884, %v2003
    %v2087 = vadd.f32 %v1887, %v2003
    %v2088 = vadd.f32 %v1889, %v2003
    %v2089 = vadd.f32 %v1892, %v2003
    %v2090 = vadd.f32 %v1894, %v2003
    %v2091 = vadd.f32 %v1897, %v2003
    %v2092 = vadd.f32 %v1899, %v2003
    %v2093 = vadd.f32 %v1902, %v2003
    %v2094 = vadd.f32 %v1904, %v2003
    %v2095 = vadd.f32 %v1907, %v2003
    %v2096 = vadd.f32 %v1909, %v2003
    %v2097 = vadd.f32 %v1912, %v2003
    %v2098 = vadd.f32 %v1914, %v2003
    %v2099 = vadd.f32 %v1917, %v2003
    %v2100 = vadd.f32 %v1919, %v2003
    %v2101 = vadd.f32 %v1922, %v2003
    %v2102 = vadd.f32 %v1924, %v2003
    %v2103 = vadd.f32 %v1927, %v2003
    %v2104 = vadd.f32 %v1929, %v2003
    %v2105 = vadd.f32 %v1932, %v2003
    %v2106 = vadd.f32 %v1934, %v2003
    %v2107 = vadd.f32 %v1937, %v2003
    %v2108 = vadd.f32 %v1939, %v2003
    %v2109 = vadd.f32 %v1942, %v2003
    %v2110 = vadd.f32 %v1944, %v2003
    %v2111 = vadd.f32 %v1947, %v2003
    %v2112 = vadd.f32 %v1949, %v2003
    %v2113 = vadd.f32 %v1952, %v2003
    %v2114 = vadd.f32 %v1954, %v2003
    %v2115 = vadd.f32 %v1957, %v2003
    %v2116 = vadd.f32 %v1959, %v2003
    %v2117 = vadd.f32 %v1962, %v2003
    %v2118 = vadd.f32 %v1964, %v2003
    %v2119 = vadd.f32 %v1967, %v2003
    %v2120 = vadd.f32 %v1969, %v2003
    %v2121 = vadd.f32 %v1972, %v2003
    %v2122 = vadd.f32 %v1974, %v2003
    %v2123 = vadd.f32 %v1977, %v2003
    %v2124 = vadd.f32 %v1979, %v2003
    %v2125 = vadd.f32 %v1982, %v2003
    %v2126 = vadd.f32 %v1984, %v2003
    %v2127 = vadd.f32 %v1987, %v2003
    %v2128 = vadd.f32 %v1989, %v2003
    %v2129 = vadd.f32 %v1992, %v2003
    %v2130 = vadd.f32 %v1994, %v2003
    %v2131 = vadd.f32 %v1997, %v2003
    %v2132 = vadd.f32 %v1999, %v2003
    %v2133 = vmax.f32 %v2005, 0.0
    %v2134 = vmax.f32 %v2006, 0.0
    %v2135 = vmax.f32 %v2007, 0.0
    %v2136 = vmax.f32 %v2008, 0.0
    %v2137 = vmax.f32 %v2009, 0.0
    %v2138 = vmax.f32 %v2010, 0.0
    %v2139 = vmax.f32 %v2011, 0.0
    %v2140 = vmax.f32 %v2012, 0.0
    %v2141 = vmax.f32 %v2013, 0.0
    %v2142 = vmax.f32 %v2014, 0.0
    %v2143 = vmax.f32 %v2015, 0.0
    %v2144 = vmax.f32 %v2016, 0.0
    %v2145 = vmax.f32 %v2017, 0.0
    %v2146 = vmax.f32 %v2018, 0.0
    %v2147 = vmax.f32 %v2019, 0.0
    %v2148 = vmax.f32 %v2020, 0.0
    %v2149 = vmax.f32 %v2021, 0.0
    %v2150 = vmax.f32 %v2022, 0.0
    %v2151 = vmax.f32 %v2023, 0.0
    %v2152 = vmax.f32 %v2024, 0.0
    %v2153 = vmax.f32 %v2025, 0.0
    %v2154 = vmax.f32 %v2026, 0.0
    %v2155 = vmax.f32 %v2027, 0.0
    %v2156 = vmax.f32 %v2028, 0.0
    %v2157 = vmax.f32 %v2029, 0.0
    %v2158 = vmax.f32 %v2030, 0.0
    %v2159 = vmax.f32 %v2031, 0.0
    %v2160 = vmax.f32 %v2032, 0.0
    %v2161 = vmax.f32 %v2033, 0.0
    %v2162 = vmax.f32 %v2034, 0.0
    %v2163 = vmax.f32 %v2035, 0.0
    %v2164 = vmax.f32 %v2036, 0.0
    %v2165 = vmax.f32 %v2037, 0.0
    %v2166 = vmax.f32 %v2038, 0.0
    %v2167 = vmax.f32 %v2039, 0.0
    %v2168 = vmax.f32 %v2040, 0.0
    %v2169 = vmax.f32 %v2041, 0.0
    %v2170 = vmax.f32 %v2042, 0.0
    %v2171 = vmax.f32 %v2043, 0.0
    %v2172 = vmax.f32 %v2044, 0.0
    %v2173 = vmax.f32 %v2045, 0.0
    %v2174 = vmax.f32 %v2046, 0.0
    %v2175 = vmax.f32 %v2047, 0.0
    %v2176 = vmax.f32 %v2048, 0.0
    %v2177 = vmax.f32 %v2049, 0.0
    %v2178 = vmax.f32 %v2050, 0.0
    %v2179 = vmax.f32 %v2051, 0.0
    %v2180 = vmax.f32 %v2052, 0.0
    %v2181 = vmax.f32 %v2053, 0.0
    %v2182 = vmax.f32 %v2054, 0.0
    %v2183 = vmax.f32 %v2055, 0.0
    %v2184 = vmax.f32 %v2056, 0.0
    %v2185 = vmax.f32 %v2057, 0.0
    %v2186 = vmax.f32 %v2058, 0.0
    %v2187 = vmax.f32 %v2059, 0.0
    %v2188 = vmax.f32 %v2060, 0.0
    %v2189 = vmax.f32 %v2061, 0.0
    %v2190 = vmax.f32 %v2062, 0.0
    %v2191 = vmax.f32 %v2063, 0.0
    %v2192 = vmax.f32 %v2064, 0.0
    %v2193 = vmax.f32 %v2065, 0.0
    %v2194 = vmax.f32 %v2066, 0.0
    %v2195 = vmax.f32 %v2067, 0.0
    %v2196 = vmax.f32 %v2068, 0.0
    %v2197 = vmax.f32 %v2069, 0.0
    %v2198 = vmax.f32 %v2070, 0.0
    %v2199 = vmax.f32 %v2071, 0.0
    %v2200 = vmax.f32 %v2072, 0.0
    %v2201 = vmax.f32 %v2073, 0.0
    %v2202 = vmax.f32 %v2074, 0.0
    %v2203 = vmax.f32 %v2075, 0.0
    %v2204 = vmax.f32 %v2076, 0.0
    %v2205 = vmax.f32 %v2077, 0.0
    %v2206 = vmax.f32 %v2078, 0.0
    %v2207 = vmax.f32 %v2079, 0.0
    %v2208 = vmax.f32 %v2080, 0.0
    %v2209 = vmax.f32 %v2081, 0.0
    %v2210 = vmax.f32 %v2082, 0.0
    %v2211 = vmax.f32 %v2083, 0.0
    %v2212 = vmax.f32 %v2084, 0.0
    %v2213 = vmax.f32 %v2085, 0.0
    %v2214 = vmax.f32 %v2086, 0.0
    %v2215 = vmax.f32 %v2087, 0.0
    %v2216 = vmax.f32 %v2088, 0.0
    %v2217 = vmax.f32 %v2089, 0.0
    %v2218 = vmax.f32 %v2090, 0.0
    %v2219 = vmax.f32 %v2091, 0.0
    %v2220 = vmax.f32 %v2092, 0.0
    %v2221 = vmax.f32 %v2093, 0.0
    %v2222 = vmax.f32 %v2094, 0.0
    %v2223 = vmax.f32 %v2095, 0.0
    %v2224 = vmax.f32 %v2096, 0.0
    %v2225 = vmax.f32 %v2097, 0.0
    %v2226 = vmax.f32 %v2098, 0.0
    %v2227 = vmax.f32 %v2099, 0.0
    %v2228 = vmax.f32 %v2100, 0.0
    %v2229 = vmax.f32 %v2101, 0.0
    %v2230 = vmax.f32 %v2102, 0.0
    %v2231 = vmax.f32 %v2103, 0.0
    %v2232 = vmax.f32 %v2104, 0.0
    %v2233 = vmax.f32 %v2105, 0.0
    %v2234 = vmax.f32 %v2106, 0.0
    %v2235 = vmax.f32 %v2107, 0.0
    %v2236 = vmax.f32 %v2108, 0.0
    %v2237 = vmax.f32 %v2109, 0.0
    %v2238 = vmax.f32 %v2110, 0.0
    %v2239 = vmax.f32 %v2111, 0.0
    %v2240 = vmax.f32 %v2112, 0.0
    %v2241 = vmax.f32 %v2113, 0.0
    %v2242 = vmax.f32 %v2114, 0.0
    %v2243 = vmax.f32 %v2115, 0.0
    %v2244 = vmax.f32 %v2116, 0.0
    %v2245 = vmax.f32 %v2117, 0.0
    %v2246 = vmax.f32 %v2118, 0.0
    %v2247 = vmax.f32 %v2119, 0.0
    %v2248 = vmax.f32 %v2120, 0.0
    %v2249 = vmax.f32 %v2121, 0.0
    %v2250 = vmax.f32 %v2122, 0.0
    %v2251 = vmax.f32 %v2123, 0.0
    %v2252 = vmax.f32 %v2124, 0.0
    %v2253 = vmax.f32 %v2125, 0.0
    %v2254 = vmax.f32 %v2126, 0.0
    %v2255 = vmax.f32 %v2127, 0.0
    %v2256 = vmax.f32 %v2128, 0.0
    %v2257 = vmax.f32 %v2129, 0.0
    %v2258 = vmax.f32 %v2130, 0.0
    %v2259 = vmax.f32 %v2131, 0.0
    %v2260 = vmax.f32 %v2132, 0.0
    %v2261 = vld [vmem:[%s5] sm:$0x1]
    %v2263 = vperm.slane %v2261, 0
    %v2265 = vmul.f32 %v2133, %v2263
    %v2266 = vmul.f32 %v2134, %v2263
    %v2267 = vmul.f32 %v2135, %v2263
    %v2268 = vmul.f32 %v2136, %v2263
    %v2269 = vmul.f32 %v2137, %v2263
    %v2270 = vmul.f32 %v2138, %v2263
    %v2271 = vmul.f32 %v2139, %v2263
    %v2272 = vmul.f32 %v2140, %v2263
    %v2273 = vmul.f32 %v2141, %v2263
    %v2274 = vmul.f32 %v2142, %v2263
    %v2275 = vmul.f32 %v2143, %v2263
    %v2276 = vmul.f32 %v2144, %v2263
    %v2277 = vmul.f32 %v2145, %v2263
    %v2278 = vmul.f32 %v2146, %v2263
    %v2279 = vmul.f32 %v2147, %v2263
    %v2280 = vmul.f32 %v2148, %v2263
    %v2281 = vmul.f32 %v2149, %v2263
    %v2282 = vmul.f32 %v2150, %v2263
    %v2283 = vmul.f32 %v2151, %v2263
    %v2284 = vmul.f32 %v2152, %v2263
    %v2285 = vmul.f32 %v2153, %v2263
    %v2286 = vmul.f32 %v2154, %v2263
    %v2287 = vmul.f32 %v2155, %v2263
    %v2288 = vmul.f32 %v2156, %v2263
    %v2289 = vmul.f32 %v2157, %v2263
    %v2290 = vmul.f32 %v2158, %v2263
    %v2291 = vmul.f32 %v2159, %v2263
    %v2292 = vmul.f32 %v2160, %v2263
    %v2293 = vmul.f32 %v2161, %v2263
    %v2294 = vmul.f32 %v2162, %v2263
    %v2295 = vmul.f32 %v2163, %v2263
    %v2296 = vmul.f32 %v2164, %v2263
    %v2297 = vmul.f32 %v2165, %v2263
    %v2298 = vmul.f32 %v2166, %v2263
    %v2299 = vmul.f32 %v2167, %v2263
    %v2300 = vmul.f32 %v2168, %v2263
    %v2301 = vmul.f32 %v2169, %v2263
    %v2302 = vmul.f32 %v2170, %v2263
    %v2303 = vmul.f32 %v2171, %v2263
    %v2304 = vmul.f32 %v2172, %v2263
    %v2305 = vmul.f32 %v2173, %v2263
    %v2306 = vmul.f32 %v2174, %v2263
    %v2307 = vmul.f32 %v2175, %v2263
    %v2308 = vmul.f32 %v2176, %v2263
    %v2309 = vmul.f32 %v2177, %v2263
    %v2310 = vmul.f32 %v2178, %v2263
    %v2311 = vmul.f32 %v2179, %v2263
    %v2312 = vmul.f32 %v2180, %v2263
    %v2313 = vmul.f32 %v2181, %v2263
    %v2314 = vmul.f32 %v2182, %v2263
    %v2315 = vmul.f32 %v2183, %v2263
    %v2316 = vmul.f32 %v2184, %v2263
    %v2317 = vmul.f32 %v2185, %v2263
    %v2318 = vmul.f32 %v2186, %v2263
    %v2319 = vmul.f32 %v2187, %v2263
    %v2320 = vmul.f32 %v2188, %v2263
    %v2321 = vmul.f32 %v2189, %v2263
    %v2322 = vmul.f32 %v2190, %v2263
    %v2323 = vmul.f32 %v2191, %v2263
    %v2324 = vmul.f32 %v2192, %v2263
    %v2325 = vmul.f32 %v2193, %v2263
    %v2326 = vmul.f32 %v2194, %v2263
    %v2327 = vmul.f32 %v2195, %v2263
    %v2328 = vmul.f32 %v2196, %v2263
    %v2329 = vmul.f32 %v2197, %v2263
    %v2330 = vmul.f32 %v2198, %v2263
    %v2331 = vmul.f32 %v2199, %v2263
    %v2332 = vmul.f32 %v2200, %v2263
    %v2333 = vmul.f32 %v2201, %v2263
    %v2334 = vmul.f32 %v2202, %v2263
    %v2335 = vmul.f32 %v2203, %v2263
    %v2336 = vmul.f32 %v2204, %v2263
    %v2337 = vmul.f32 %v2205, %v2263
    %v2338 = vmul.f32 %v2206, %v2263
    %v2339 = vmul.f32 %v2207, %v2263
    %v2340 = vmul.f32 %v2208, %v2263
    %v2341 = vmul.f32 %v2209, %v2263
    %v2342 = vmul.f32 %v2210, %v2263
    %v2343 = vmul.f32 %v2211, %v2263
    %v2344 = vmul.f32 %v2212, %v2263
    %v2345 = vmul.f32 %v2213, %v2263
    %v2346 = vmul.f32 %v2214, %v2263
    %v2347 = vmul.f32 %v2215, %v2263
    %v2348 = vmul.f32 %v2216, %v2263
    %v2349 = vmul.f32 %v2217, %v2263
    %v2350 = vmul.f32 %v2218, %v2263
    %v2351 = vmul.f32 %v2219, %v2263
    %v2352 = vmul.f32 %v2220, %v2263
    %v2353 = vmul.f32 %v2221, %v2263
    %v2354 = vmul.f32 %v2222, %v2263
    %v2355 = vmul.f32 %v2223, %v2263
    %v2356 = vmul.f32 %v2224, %v2263
    %v2357 = vmul.f32 %v2225, %v2263
    %v2358 = vmul.f32 %v2226, %v2263
    %v2359 = vmul.f32 %v2227, %v2263
    %v2360 = vmul.f32 %v2228, %v2263
    %v2361 = vmul.f32 %v2229, %v2263
    %v2362 = vmul.f32 %v2230, %v2263
    %v2363 = vmul.f32 %v2231, %v2263
    %v2364 = vmul.f32 %v2232, %v2263
    %v2365 = vmul.f32 %v2233, %v2263
    %v2366 = vmul.f32 %v2234, %v2263
    %v2367 = vmul.f32 %v2235, %v2263
    %v2368 = vmul.f32 %v2236, %v2263
    %v2369 = vmul.f32 %v2237, %v2263
    %v2370 = vmul.f32 %v2238, %v2263
    %v2371 = vmul.f32 %v2239, %v2263
    %v2372 = vmul.f32 %v2240, %v2263
    %v2373 = vmul.f32 %v2241, %v2263
    %v2374 = vmul.f32 %v2242, %v2263
    %v2375 = vmul.f32 %v2243, %v2263
    %v2376 = vmul.f32 %v2244, %v2263
    %v2377 = vmul.f32 %v2245, %v2263
    %v2378 = vmul.f32 %v2246, %v2263
    %v2379 = vmul.f32 %v2247, %v2263
    %v2380 = vmul.f32 %v2248, %v2263
    %v2381 = vmul.f32 %v2249, %v2263
    %v2382 = vmul.f32 %v2250, %v2263
    %v2383 = vmul.f32 %v2251, %v2263
    %v2384 = vmul.f32 %v2252, %v2263
    %v2385 = vmul.f32 %v2253, %v2263
    %v2386 = vmul.f32 %v2254, %v2263
    %v2387 = vmul.f32 %v2255, %v2263
    %v2388 = vmul.f32 %v2256, %v2263
    %v2389 = vmul.f32 %v2257, %v2263
    %v2390 = vmul.f32 %v2258, %v2263
    %v2391 = vmul.f32 %v2259, %v2263
    %v2392 = vmul.f32 %v2260, %v2263
    %v2393 = vsel %vm626, %v2265, 0.0
    %2394 = vadd.xlane.f32.xlu0 %v2393
    %v2395 = vpop.xlane.xlu0 %2394
    %v2396 = vsel %vm626, %v2266, 0.0
    %2397 = vadd.xlane.f32.xlu0 %v2396
    %v2398 = vpop.xlane.xlu0 %2397
    %v2399 = vsel %vm626, %v2267, 0.0
    %2400 = vadd.xlane.f32.xlu0 %v2399
    %v2401 = vpop.xlane.xlu0 %2400
    %v2402 = vsel %vm626, %v2268, 0.0
    %2403 = vadd.xlane.f32.xlu0 %v2402
    %v2404 = vpop.xlane.xlu0 %2403
    %v2405 = vsel %vm626, %v2269, 0.0
    %2406 = vadd.xlane.f32.xlu0 %v2405
    %v2407 = vpop.xlane.xlu0 %2406
    %v2408 = vsel %vm626, %v2270, 0.0
    %2409 = vadd.xlane.f32.xlu0 %v2408
    %v2410 = vpop.xlane.xlu0 %2409
    %v2411 = vsel %vm626, %v2271, 0.0
    %2412 = vadd.xlane.f32.xlu0 %v2411
    %v2413 = vpop.xlane.xlu0 %2412
    %v2414 = vsel %vm626, %v2272, 0.0
    %2415 = vadd.xlane.f32.xlu0 %v2414
    %v2416 = vpop.xlane.xlu0 %2415
    %v2417 = vsel %vm626, %v2273, 0.0
    %2418 = vadd.xlane.f32.xlu0 %v2417
    %v2419 = vpop.xlane.xlu0 %2418
    %v2420 = vsel %vm626, %v2274, 0.0
    %2421 = vadd.xlane.f32.xlu0 %v2420
    %v2422 = vpop.xlane.xlu0 %2421
    %v2423 = vsel %vm626, %v2275, 0.0
    %2424 = vadd.xlane.f32.xlu0 %v2423
    %v2425 = vpop.xlane.xlu0 %2424
    %v2426 = vsel %vm626, %v2276, 0.0
    %2427 = vadd.xlane.f32.xlu0 %v2426
    %v2428 = vpop.xlane.xlu0 %2427
    %v2429 = vsel %vm626, %v2277, 0.0
    %2430 = vadd.xlane.f32.xlu0 %v2429
    %v2431 = vpop.xlane.xlu0 %2430
    %v2432 = vsel %vm626, %v2278, 0.0
    %2433 = vadd.xlane.f32.xlu0 %v2432
    %v2434 = vpop.xlane.xlu0 %2433
    %v2435 = vsel %vm626, %v2279, 0.0
    %2436 = vadd.xlane.f32.xlu0 %v2435
    %v2437 = vpop.xlane.xlu0 %2436
    %v2438 = vsel %vm626, %v2280, 0.0
    %2439 = vadd.xlane.f32.xlu0 %v2438
    %v2440 = vpop.xlane.xlu0 %2439
    %v2441 = vsel %vm626, %v2281, 0.0
    %2442 = vadd.xlane.f32.xlu0 %v2441
    %v2443 = vpop.xlane.xlu0 %2442
    %v2444 = vsel %vm626, %v2282, 0.0
    %2445 = vadd.xlane.f32.xlu0 %v2444
    %v2446 = vpop.xlane.xlu0 %2445
    %v2447 = vsel %vm626, %v2283, 0.0
    %2448 = vadd.xlane.f32.xlu0 %v2447
    %v2449 = vpop.xlane.xlu0 %2448
    %v2450 = vsel %vm626, %v2284, 0.0
    %2451 = vadd.xlane.f32.xlu0 %v2450
    %v2452 = vpop.xlane.xlu0 %2451
    %v2453 = vsel %vm626, %v2285, 0.0
    %2454 = vadd.xlane.f32.xlu0 %v2453
    %v2455 = vpop.xlane.xlu0 %2454
    %v2456 = vsel %vm626, %v2286, 0.0
    %2457 = vadd.xlane.f32.xlu0 %v2456
    %v2458 = vpop.xlane.xlu0 %2457
    %v2459 = vsel %vm626, %v2287, 0.0
    %2460 = vadd.xlane.f32.xlu0 %v2459
    %v2461 = vpop.xlane.xlu0 %2460
    %v2462 = vsel %vm626, %v2288, 0.0
    %2463 = vadd.xlane.f32.xlu0 %v2462
    %v2464 = vpop.xlane.xlu0 %2463
    %v2465 = vsel %vm626, %v2289, 0.0
    %2466 = vadd.xlane.f32.xlu0 %v2465
    %v2467 = vpop.xlane.xlu0 %2466
    %v2468 = vsel %vm626, %v2290, 0.0
    %2469 = vadd.xlane.f32.xlu0 %v2468
    %v2470 = vpop.xlane.xlu0 %2469
    %v2471 = vsel %vm626, %v2291, 0.0
    %2472 = vadd.xlane.f32.xlu0 %v2471
    %v2473 = vpop.xlane.xlu0 %2472
    %v2474 = vsel %vm626, %v2292, 0.0
    %2475 = vadd.xlane.f32.xlu0 %v2474
    %v2476 = vpop.xlane.xlu0 %2475
    %v2477 = vsel %vm626, %v2293, 0.0
    %2478 = vadd.xlane.f32.xlu0 %v2477
    %v2479 = vpop.xlane.xlu0 %2478
    %v2480 = vsel %vm626, %v2294, 0.0
    %2481 = vadd.xlane.f32.xlu0 %v2480
    %v2482 = vpop.xlane.xlu0 %2481
    %v2483 = vsel %vm626, %v2295, 0.0
    %2484 = vadd.xlane.f32.xlu0 %v2483
    %v2485 = vpop.xlane.xlu0 %2484
    %v2486 = vsel %vm626, %v2296, 0.0
    %2487 = vadd.xlane.f32.xlu0 %v2486
    %v2488 = vpop.xlane.xlu0 %2487
    %v2489 = vsel %vm626, %v2297, 0.0
    %2490 = vadd.xlane.f32.xlu0 %v2489
    %v2491 = vpop.xlane.xlu0 %2490
    %v2492 = vsel %vm626, %v2298, 0.0
    %2493 = vadd.xlane.f32.xlu0 %v2492
    %v2494 = vpop.xlane.xlu0 %2493
    %v2495 = vsel %vm626, %v2299, 0.0
    %2496 = vadd.xlane.f32.xlu0 %v2495
    %v2497 = vpop.xlane.xlu0 %2496
    %v2498 = vsel %vm626, %v2300, 0.0
    %2499 = vadd.xlane.f32.xlu0 %v2498
    %v2500 = vpop.xlane.xlu0 %2499
    %v2501 = vsel %vm626, %v2301, 0.0
    %2502 = vadd.xlane.f32.xlu0 %v2501
    %v2503 = vpop.xlane.xlu0 %2502
    %v2504 = vsel %vm626, %v2302, 0.0
    %2505 = vadd.xlane.f32.xlu0 %v2504
    %v2506 = vpop.xlane.xlu0 %2505
    %v2507 = vsel %vm626, %v2303, 0.0
    %2508 = vadd.xlane.f32.xlu0 %v2507
    %v2509 = vpop.xlane.xlu0 %2508
    %v2510 = vsel %vm626, %v2304, 0.0
    %2511 = vadd.xlane.f32.xlu0 %v2510
    %v2512 = vpop.xlane.xlu0 %2511
    %v2513 = vsel %vm626, %v2305, 0.0
    %2514 = vadd.xlane.f32.xlu0 %v2513
    %v2515 = vpop.xlane.xlu0 %2514
    %v2516 = vsel %vm626, %v2306, 0.0
    %2517 = vadd.xlane.f32.xlu0 %v2516
    %v2518 = vpop.xlane.xlu0 %2517
    %v2519 = vsel %vm626, %v2307, 0.0
    %2520 = vadd.xlane.f32.xlu0 %v2519
    %v2521 = vpop.xlane.xlu0 %2520
    %v2522 = vsel %vm626, %v2308, 0.0
    %2523 = vadd.xlane.f32.xlu0 %v2522
    %v2524 = vpop.xlane.xlu0 %2523
    %v2525 = vsel %vm626, %v2309, 0.0
    %2526 = vadd.xlane.f32.xlu0 %v2525
    %v2527 = vpop.xlane.xlu0 %2526
    %v2528 = vsel %vm626, %v2310, 0.0
    %2529 = vadd.xlane.f32.xlu0 %v2528
    %v2530 = vpop.xlane.xlu0 %2529
    %v2531 = vsel %vm626, %v2311, 0.0
    %2532 = vadd.xlane.f32.xlu0 %v2531
    %v2533 = vpop.xlane.xlu0 %2532
    %v2534 = vsel %vm626, %v2312, 0.0
    %2535 = vadd.xlane.f32.xlu0 %v2534
    %v2536 = vpop.xlane.xlu0 %2535
    %v2537 = vsel %vm626, %v2313, 0.0
    %2538 = vadd.xlane.f32.xlu0 %v2537
    %v2539 = vpop.xlane.xlu0 %2538
    %v2540 = vsel %vm626, %v2314, 0.0
    %2541 = vadd.xlane.f32.xlu0 %v2540
    %v2542 = vpop.xlane.xlu0 %2541
    %v2543 = vsel %vm626, %v2315, 0.0
    %2544 = vadd.xlane.f32.xlu0 %v2543
    %v2545 = vpop.xlane.xlu0 %2544
    %v2546 = vsel %vm626, %v2316, 0.0
    %2547 = vadd.xlane.f32.xlu0 %v2546
    %v2548 = vpop.xlane.xlu0 %2547
    %v2549 = vsel %vm626, %v2317, 0.0
    %2550 = vadd.xlane.f32.xlu0 %v2549
    %v2551 = vpop.xlane.xlu0 %2550
    %v2552 = vsel %vm626, %v2318, 0.0
    %2553 = vadd.xlane.f32.xlu0 %v2552
    %v2554 = vpop.xlane.xlu0 %2553
    %v2555 = vsel %vm626, %v2319, 0.0
    %2556 = vadd.xlane.f32.xlu0 %v2555
    %v2557 = vpop.xlane.xlu0 %2556
    %v2558 = vsel %vm626, %v2320, 0.0
    %2559 = vadd.xlane.f32.xlu0 %v2558
    %v2560 = vpop.xlane.xlu0 %2559
    %v2561 = vsel %vm626, %v2321, 0.0
    %2562 = vadd.xlane.f32.xlu0 %v2561
    %v2563 = vpop.xlane.xlu0 %2562
    %v2564 = vsel %vm626, %v2322, 0.0
    %2565 = vadd.xlane.f32.xlu0 %v2564
    %v2566 = vpop.xlane.xlu0 %2565
    %v2567 = vsel %vm626, %v2323, 0.0
    %2568 = vadd.xlane.f32.xlu0 %v2567
    %v2569 = vpop.xlane.xlu0 %2568
    %v2570 = vsel %vm626, %v2324, 0.0
    %2571 = vadd.xlane.f32.xlu0 %v2570
    %v2572 = vpop.xlane.xlu0 %2571
    %v2573 = vsel %vm626, %v2325, 0.0
    %2574 = vadd.xlane.f32.xlu0 %v2573
    %v2575 = vpop.xlane.xlu0 %2574
    %v2576 = vsel %vm626, %v2326, 0.0
    %2577 = vadd.xlane.f32.xlu0 %v2576
    %v2578 = vpop.xlane.xlu0 %2577
    %v2579 = vsel %vm626, %v2327, 0.0
    %2580 = vadd.xlane.f32.xlu0 %v2579
    %v2581 = vpop.xlane.xlu0 %2580
    %v2582 = vsel %vm626, %v2328, 0.0
    %2583 = vadd.xlane.f32.xlu0 %v2582
    %v2584 = vpop.xlane.xlu0 %2583
    %v2585 = vsel %vm626, %v2329, 0.0
    %2586 = vadd.xlane.f32.xlu0 %v2585
    %v2587 = vpop.xlane.xlu0 %2586
    %v2588 = vsel %vm626, %v2330, 0.0
    %2589 = vadd.xlane.f32.xlu0 %v2588
    %v2590 = vpop.xlane.xlu0 %2589
    %v2591 = vsel %vm626, %v2331, 0.0
    %2592 = vadd.xlane.f32.xlu0 %v2591
    %v2593 = vpop.xlane.xlu0 %2592
    %v2594 = vsel %vm626, %v2332, 0.0
    %2595 = vadd.xlane.f32.xlu0 %v2594
    %v2596 = vpop.xlane.xlu0 %2595
    %v2597 = vsel %vm626, %v2333, 0.0
    %2598 = vadd.xlane.f32.xlu0 %v2597
    %v2599 = vpop.xlane.xlu0 %2598
    %v2600 = vsel %vm626, %v2334, 0.0
    %2601 = vadd.xlane.f32.xlu0 %v2600
    %v2602 = vpop.xlane.xlu0 %2601
    %v2603 = vsel %vm626, %v2335, 0.0
    %2604 = vadd.xlane.f32.xlu0 %v2603
    %v2605 = vpop.xlane.xlu0 %2604
    %v2606 = vsel %vm626, %v2336, 0.0
    %2607 = vadd.xlane.f32.xlu0 %v2606
    %v2608 = vpop.xlane.xlu0 %2607
    %v2609 = vsel %vm626, %v2337, 0.0
    %2610 = vadd.xlane.f32.xlu0 %v2609
    %v2611 = vpop.xlane.xlu0 %2610
    %v2612 = vsel %vm626, %v2338, 0.0
    %2613 = vadd.xlane.f32.xlu0 %v2612
    %v2614 = vpop.xlane.xlu0 %2613
    %v2615 = vsel %vm626, %v2339, 0.0
    %2616 = vadd.xlane.f32.xlu0 %v2615
    %v2617 = vpop.xlane.xlu0 %2616
    %v2618 = vsel %vm626, %v2340, 0.0
    %2619 = vadd.xlane.f32.xlu0 %v2618
    %v2620 = vpop.xlane.xlu0 %2619
    %v2621 = vsel %vm626, %v2341, 0.0
    %2622 = vadd.xlane.f32.xlu0 %v2621
    %v2623 = vpop.xlane.xlu0 %2622
    %v2624 = vsel %vm626, %v2342, 0.0
    %2625 = vadd.xlane.f32.xlu0 %v2624
    %v2626 = vpop.xlane.xlu0 %2625
    %v2627 = vsel %vm626, %v2343, 0.0
    %2628 = vadd.xlane.f32.xlu0 %v2627
    %v2629 = vpop.xlane.xlu0 %2628
    %v2630 = vsel %vm626, %v2344, 0.0
    %2631 = vadd.xlane.f32.xlu0 %v2630
    %v2632 = vpop.xlane.xlu0 %2631
    %v2633 = vsel %vm626, %v2345, 0.0
    %2634 = vadd.xlane.f32.xlu0 %v2633
    %v2635 = vpop.xlane.xlu0 %2634
    %v2636 = vsel %vm626, %v2346, 0.0
    %2637 = vadd.xlane.f32.xlu0 %v2636
    %v2638 = vpop.xlane.xlu0 %2637
    %v2639 = vsel %vm626, %v2347, 0.0
    %2640 = vadd.xlane.f32.xlu0 %v2639
    %v2641 = vpop.xlane.xlu0 %2640
    %v2642 = vsel %vm626, %v2348, 0.0
    %2643 = vadd.xlane.f32.xlu0 %v2642
    %v2644 = vpop.xlane.xlu0 %2643
    %v2645 = vsel %vm626, %v2349, 0.0
    %2646 = vadd.xlane.f32.xlu0 %v2645
    %v2647 = vpop.xlane.xlu0 %2646
    %v2648 = vsel %vm626, %v2350, 0.0
    %2649 = vadd.xlane.f32.xlu0 %v2648
    %v2650 = vpop.xlane.xlu0 %2649
    %v2651 = vsel %vm626, %v2351, 0.0
    %2652 = vadd.xlane.f32.xlu0 %v2651
    %v2653 = vpop.xlane.xlu0 %2652
    %v2654 = vsel %vm626, %v2352, 0.0
    %2655 = vadd.xlane.f32.xlu0 %v2654
    %v2656 = vpop.xlane.xlu0 %2655
    %v2657 = vsel %vm626, %v2353, 0.0
    %2658 = vadd.xlane.f32.xlu0 %v2657
    %v2659 = vpop.xlane.xlu0 %2658
    %v2660 = vsel %vm626, %v2354, 0.0
    %2661 = vadd.xlane.f32.xlu0 %v2660
    %v2662 = vpop.xlane.xlu0 %2661
    %v2663 = vsel %vm626, %v2355, 0.0
    %2664 = vadd.xlane.f32.xlu0 %v2663
    %v2665 = vpop.xlane.xlu0 %2664
    %v2666 = vsel %vm626, %v2356, 0.0
    %2667 = vadd.xlane.f32.xlu0 %v2666
    %v2668 = vpop.xlane.xlu0 %2667
    %v2669 = vsel %vm626, %v2357, 0.0
    %2670 = vadd.xlane.f32.xlu0 %v2669
    %v2671 = vpop.xlane.xlu0 %2670
    %v2672 = vsel %vm626, %v2358, 0.0
    %2673 = vadd.xlane.f32.xlu0 %v2672
    %v2674 = vpop.xlane.xlu0 %2673
    %v2675 = vsel %vm626, %v2359, 0.0
    %2676 = vadd.xlane.f32.xlu0 %v2675
    %v2677 = vpop.xlane.xlu0 %2676
    %v2678 = vsel %vm626, %v2360, 0.0
    %2679 = vadd.xlane.f32.xlu0 %v2678
    %v2680 = vpop.xlane.xlu0 %2679
    %v2681 = vsel %vm626, %v2361, 0.0
    %2682 = vadd.xlane.f32.xlu0 %v2681
    %v2683 = vpop.xlane.xlu0 %2682
    %v2684 = vsel %vm626, %v2362, 0.0
    %2685 = vadd.xlane.f32.xlu0 %v2684
    %v2686 = vpop.xlane.xlu0 %2685
    %v2687 = vsel %vm626, %v2363, 0.0
    %2688 = vadd.xlane.f32.xlu0 %v2687
    %v2689 = vpop.xlane.xlu0 %2688
    %v2690 = vsel %vm626, %v2364, 0.0
    %2691 = vadd.xlane.f32.xlu0 %v2690
    %v2692 = vpop.xlane.xlu0 %2691
    %v2693 = vsel %vm626, %v2365, 0.0
    %2694 = vadd.xlane.f32.xlu0 %v2693
    %v2695 = vpop.xlane.xlu0 %2694
    %v2696 = vsel %vm626, %v2366, 0.0
    %2697 = vadd.xlane.f32.xlu0 %v2696
    %v2698 = vpop.xlane.xlu0 %2697
    %v2699 = vsel %vm626, %v2367, 0.0
    %2700 = vadd.xlane.f32.xlu0 %v2699
    %v2701 = vpop.xlane.xlu0 %2700
    %v2702 = vsel %vm626, %v2368, 0.0
    %2703 = vadd.xlane.f32.xlu0 %v2702
    %v2704 = vpop.xlane.xlu0 %2703
    %v2705 = vsel %vm626, %v2369, 0.0
    %2706 = vadd.xlane.f32.xlu0 %v2705
    %v2707 = vpop.xlane.xlu0 %2706
    %v2708 = vsel %vm626, %v2370, 0.0
    %2709 = vadd.xlane.f32.xlu0 %v2708
    %v2710 = vpop.xlane.xlu0 %2709
    %v2711 = vsel %vm626, %v2371, 0.0
    %2712 = vadd.xlane.f32.xlu0 %v2711
    %v2713 = vpop.xlane.xlu0 %2712
    %v2714 = vsel %vm626, %v2372, 0.0
    %2715 = vadd.xlane.f32.xlu0 %v2714
    %v2716 = vpop.xlane.xlu0 %2715
    %v2717 = vsel %vm626, %v2373, 0.0
    %2718 = vadd.xlane.f32.xlu0 %v2717
    %v2719 = vpop.xlane.xlu0 %2718
    %v2720 = vsel %vm626, %v2374, 0.0
    %2721 = vadd.xlane.f32.xlu0 %v2720
    %v2722 = vpop.xlane.xlu0 %2721
    %v2723 = vsel %vm626, %v2375, 0.0
    %2724 = vadd.xlane.f32.xlu0 %v2723
    %v2725 = vpop.xlane.xlu0 %2724
    %v2726 = vsel %vm626, %v2376, 0.0
    %2727 = vadd.xlane.f32.xlu0 %v2726
    %v2728 = vpop.xlane.xlu0 %2727
    %v2729 = vsel %vm626, %v2377, 0.0
    %2730 = vadd.xlane.f32.xlu0 %v2729
    %v2731 = vpop.xlane.xlu0 %2730
    %v2732 = vsel %vm626, %v2378, 0.0
    %2733 = vadd.xlane.f32.xlu0 %v2732
    %v2734 = vpop.xlane.xlu0 %2733
    %v2735 = vsel %vm626, %v2379, 0.0
    %2736 = vadd.xlane.f32.xlu0 %v2735
    %v2737 = vpop.xlane.xlu0 %2736
    %v2738 = vsel %vm626, %v2380, 0.0
    %2739 = vadd.xlane.f32.xlu0 %v2738
    %v2740 = vpop.xlane.xlu0 %2739
    %v2741 = vsel %vm626, %v2381, 0.0
    %2742 = vadd.xlane.f32.xlu0 %v2741
    %v2743 = vpop.xlane.xlu0 %2742
    %v2744 = vsel %vm626, %v2382, 0.0
    %2745 = vadd.xlane.f32.xlu0 %v2744
    %v2746 = vpop.xlane.xlu0 %2745
    %v2747 = vsel %vm626, %v2383, 0.0
    %2748 = vadd.xlane.f32.xlu0 %v2747
    %v2749 = vpop.xlane.xlu0 %2748
    %v2750 = vsel %vm626, %v2384, 0.0
    %2751 = vadd.xlane.f32.xlu0 %v2750
    %v2752 = vpop.xlane.xlu0 %2751
    %v2753 = vsel %vm626, %v2385, 0.0
    %2754 = vadd.xlane.f32.xlu0 %v2753
    %v2755 = vpop.xlane.xlu0 %2754
    %v2756 = vsel %vm626, %v2386, 0.0
    %2757 = vadd.xlane.f32.xlu0 %v2756
    %v2758 = vpop.xlane.xlu0 %2757
    %v2759 = vsel %vm626, %v2387, 0.0
    %2760 = vadd.xlane.f32.xlu0 %v2759
    %v2761 = vpop.xlane.xlu0 %2760
    %v2762 = vsel %vm626, %v2388, 0.0
    %2763 = vadd.xlane.f32.xlu0 %v2762
    %v2764 = vpop.xlane.xlu0 %2763
    %v2765 = vsel %vm626, %v2389, 0.0
    %2766 = vadd.xlane.f32.xlu0 %v2765
    %v2767 = vpop.xlane.xlu0 %2766
    %v2768 = vsel %vm626, %v2390, 0.0
    %2769 = vadd.xlane.f32.xlu0 %v2768
    %v2770 = vpop.xlane.xlu0 %2769
    %v2771 = vsel %vm626, %v2391, 0.0
    %2772 = vadd.xlane.f32.xlu0 %v2771
    %v2773 = vpop.xlane.xlu0 %2772
    %v2774 = vsel %vm626, %v2392, 0.0
    %2775 = vadd.xlane.f32.xlu0 %v2774
    %v2776 = vpop.xlane.xlu0 %2775
    %v2777 = vld [vmem:[#allocation2] sm:$0x1]
    %v2779 = vperm.slane %v2777, 0
    %2780 = vset.pattern.permute.xlu0 0
    %2781 = vperm.xlu0 %2780, %v2779
    %v2782 = vpop.permute.xlu0 %2781
    %v2784 = vadd.f32 %v2395, %v2782
    %v2785 = vadd.f32 %v2398, %v2782
    %v2786 = vadd.f32 %v2401, %v2782
    %v2787 = vadd.f32 %v2404, %v2782
    %v2788 = vadd.f32 %v2407, %v2782
    %v2789 = vadd.f32 %v2410, %v2782
    %v2790 = vadd.f32 %v2413, %v2782
    %v2791 = vadd.f32 %v2416, %v2782
    %v2792 = vadd.f32 %v2419, %v2782
    %v2793 = vadd.f32 %v2422, %v2782
    %v2794 = vadd.f32 %v2425, %v2782
    %v2795 = vadd.f32 %v2428, %v2782
    %v2796 = vadd.f32 %v2431, %v2782
    %v2797 = vadd.f32 %v2434, %v2782
    %v2798 = vadd.f32 %v2437, %v2782
    %v2799 = vadd.f32 %v2440, %v2782
    %v2800 = vadd.f32 %v2443, %v2782
    %v2801 = vadd.f32 %v2446, %v2782
    %v2802 = vadd.f32 %v2449, %v2782
    %v2803 = vadd.f32 %v2452, %v2782
    %v2804 = vadd.f32 %v2455, %v2782
    %v2805 = vadd.f32 %v2458, %v2782
    %v2806 = vadd.f32 %v2461, %v2782
    %v2807 = vadd.f32 %v2464, %v2782
    %v2808 = vadd.f32 %v2467, %v2782
    %v2809 = vadd.f32 %v2470, %v2782
    %v2810 = vadd.f32 %v2473, %v2782
    %v2811 = vadd.f32 %v2476, %v2782
    %v2812 = vadd.f32 %v2479, %v2782
    %v2813 = vadd.f32 %v2482, %v2782
    %v2814 = vadd.f32 %v2485, %v2782
    %v2815 = vadd.f32 %v2488, %v2782
    %v2816 = vadd.f32 %v2491, %v2782
    %v2817 = vadd.f32 %v2494, %v2782
    %v2818 = vadd.f32 %v2497, %v2782
    %v2819 = vadd.f32 %v2500, %v2782
    %v2820 = vadd.f32 %v2503, %v2782
    %v2821 = vadd.f32 %v2506, %v2782
    %v2822 = vadd.f32 %v2509, %v2782
    %v2823 = vadd.f32 %v2512, %v2782
    %v2824 = vadd.f32 %v2515, %v2782
    %v2825 = vadd.f32 %v2518, %v2782
    %v2826 = vadd.f32 %v2521, %v2782
    %v2827 = vadd.f32 %v2524, %v2782
    %v2828 = vadd.f32 %v2527, %v2782
    %v2829 = vadd.f32 %v2530, %v2782
    %v2830 = vadd.f32 %v2533, %v2782
    %v2831 = vadd.f32 %v2536, %v2782
    %v2832 = vadd.f32 %v2539, %v2782
    %v2833 = vadd.f32 %v2542, %v2782
    %v2834 = vadd.f32 %v2545, %v2782
    %v2835 = vadd.f32 %v2548, %v2782
    %v2836 = vadd.f32 %v2551, %v2782
    %v2837 = vadd.f32 %v2554, %v2782
    %v2838 = vadd.f32 %v2557, %v2782
    %v2839 = vadd.f32 %v2560, %v2782
    %v2840 = vadd.f32 %v2563, %v2782
    %v2841 = vadd.f32 %v2566, %v2782
    %v2842 = vadd.f32 %v2569, %v2782
    %v2843 = vadd.f32 %v2572, %v2782
    %v2844 = vadd.f32 %v2575, %v2782
    %v2845 = vadd.f32 %v2578, %v2782
    %v2846 = vadd.f32 %v2581, %v2782
    %v2847 = vadd.f32 %v2584, %v2782
    %v2848 = vadd.f32 %v2587, %v2782
    %v2849 = vadd.f32 %v2590, %v2782
    %v2850 = vadd.f32 %v2593, %v2782
    %v2851 = vadd.f32 %v2596, %v2782
    %v2852 = vadd.f32 %v2599, %v2782
    %v2853 = vadd.f32 %v2602, %v2782
    %v2854 = vadd.f32 %v2605, %v2782
    %v2855 = vadd.f32 %v2608, %v2782
    %v2856 = vadd.f32 %v2611, %v2782
    %v2857 = vadd.f32 %v2614, %v2782
    %v2858 = vadd.f32 %v2617, %v2782
    %v2859 = vadd.f32 %v2620, %v2782
    %v2860 = vadd.f32 %v2623, %v2782
    %v2861 = vadd.f32 %v2626, %v2782
    %v2862 = vadd.f32 %v2629, %v2782
    %v2863 = vadd.f32 %v2632, %v2782
    %v2864 = vadd.f32 %v2635, %v2782
    %v2865 = vadd.f32 %v2638, %v2782
    %v2866 = vadd.f32 %v2641, %v2782
    %v2867 = vadd.f32 %v2644, %v2782
    %v2868 = vadd.f32 %v2647, %v2782
    %v2869 = vadd.f32 %v2650, %v2782
    %v2870 = vadd.f32 %v2653, %v2782
    %v2871 = vadd.f32 %v2656, %v2782
    %v2872 = vadd.f32 %v2659, %v2782
    %v2873 = vadd.f32 %v2662, %v2782
    %v2874 = vadd.f32 %v2665, %v2782
    %v2875 = vadd.f32 %v2668, %v2782
    %v2876 = vadd.f32 %v2671, %v2782
    %v2877 = vadd.f32 %v2674, %v2782
    %v2878 = vadd.f32 %v2677, %v2782
    %v2879 = vadd.f32 %v2680, %v2782
    %v2880 = vadd.f32 %v2683, %v2782
    %v2881 = vadd.f32 %v2686, %v2782
    %v2882 = vadd.f32 %v2689, %v2782
    %v2883 = vadd.f32 %v2692, %v2782
    %v2884 = vadd.f32 %v2695, %v2782
    %v2885 = vadd.f32 %v2698, %v2782
    %v2886 = vadd.f32 %v2701, %v2782
    %v2887 = vadd.f32 %v2704, %v2782
    %v2888 = vadd.f32 %v2707, %v2782
    %v2889 = vadd.f32 %v2710, %v2782
    %v2890 = vadd.f32 %v2713, %v2782
    %v2891 = vadd.f32 %v2716, %v2782
    %v2892 = vadd.f32 %v2719, %v2782
    %v2893 = vadd.f32 %v2722, %v2782
    %v2894 = vadd.f32 %v2725, %v2782
    %v2895 = vadd.f32 %v2728, %v2782
    %v2896 = vadd.f32 %v2731, %v2782
    %v2897 = vadd.f32 %v2734, %v2782
    %v2898 = vadd.f32 %v2737, %v2782
    %v2899 = vadd.f32 %v2740, %v2782
    %v2900 = vadd.f32 %v2743, %v2782
    %v2901 = vadd.f32 %v2746, %v2782
    %v2902 = vadd.f32 %v2749, %v2782
    %v2903 = vadd.f32 %v2752, %v2782
    %v2904 = vadd.f32 %v2755, %v2782
    %v2905 = vadd.f32 %v2758, %v2782
    %v2906 = vadd.f32 %v2761, %v2782
    %v2907 = vadd.f32 %v2764, %v2782
    %v2908 = vadd.f32 %v2767, %v2782
    %v2909 = vadd.f32 %v2770, %v2782
    %v2910 = vadd.f32 %v2773, %v2782
    %v2911 = vadd.f32 %v2776, %v2782
    %v3040 = vlaneseq
    %v3041 = vand.u32 %v3040, 127
    %v3042 = vperm.slane %v2784, %v3041
    %v3043 = vadd.s32 %v3041, 4294967288
    %v3044 = vperm.slane %v2785, %v3043
    %vm3045 = vcmask 130112
    %v3046 = vsel %vm3045, %v3044, %v3042
    %v3047 = vadd.s32 %v3041, 4294967280
    %v3048 = vperm.slane %v2786, %v3047
    %vm3049 = vcmask 195712
    %v3050 = vsel %vm3049, %v3048, %v3046
    %v3051 = vadd.s32 %v3041, 4294967272
    %v3052 = vperm.slane %v2787, %v3051
    %vm3053 = vcmask 261312
    %v3054 = vsel %vm3053, %v3052, %v3050
    %v3055 = vadd.s32 %v3041, 4294967264
    %v3056 = vperm.slane %v2788, %v3055
    %vm3057 = vcmask 326912
    %v3058 = vsel %vm3057, %v3056, %v3054
    %v3059 = vadd.s32 %v3041, 4294967256
    %v3060 = vperm.slane %v2789, %v3059
    %vm3061 = vcmask 392512
    %v3062 = vsel %vm3061, %v3060, %v3058
    %v3063 = vadd.s32 %v3041, 4294967248
    %v3064 = vperm.slane %v2790, %v3063
    %vm3065 = vcmask 458112
    %v3066 = vsel %vm3065, %v3064, %v3062
    %v3067 = vadd.s32 %v3041, 4294967240
    %v3068 = vperm.slane %v2791, %v3067
    %vm3069 = vcmask 523712
    %v3070 = vsel %vm3069, %v3068, %v3066
    %v3071 = vadd.s32 %v3041, 4294967232
    %v3072 = vperm.slane %v2792, %v3071
    %vm3073 = vcmask 589312
    %v3074 = vsel %vm3073, %v3072, %v3070
    %v3075 = vadd.s32 %v3041, 4294967224
    %v3076 = vperm.slane %v2793, %v3075
    %vm3077 = vcmask 654912
    %v3078 = vsel %vm3077, %v3076, %v3074
    %v3079 = vadd.s32 %v3041, 4294967216
    %v3080 = vperm.slane %v2794, %v3079
    %vm3081 = vcmask 720512
    %v3082 = vsel %vm3081, %v3080, %v3078
    %v3083 = vadd.s32 %v3041, 4294967208
    %v3084 = vperm.slane %v2795, %v3083
    %vm3085 = vcmask 786112
    %v3086 = vsel %vm3085, %v3084, %v3082
    %v3087 = vadd.s32 %v3041, 4294967200
    %v3088 = vperm.slane %v2796, %v3087
    %vm3089 = vcmask 851712
    %v3090 = vsel %vm3089, %v3088, %v3086
    %v3091 = vadd.s32 %v3041, 4294967192
    %v3092 = vperm.slane %v2797, %v3091
    %vm3093 = vcmask 917312
    %v3094 = vsel %vm3093, %v3092, %v3090
    %v3095 = vadd.s32 %v3041, 4294967184
    %v3096 = vperm.slane %v2798, %v3095
    %vm3097 = vcmask 982912
    %v3098 = vsel %vm3097, %v3096, %v3094
    %v3099 = vadd.s32 %v3041, 4294967176
    %v3100 = vperm.slane %v2799, %v3099
    %vm3101 = vcmask 1048512
    %v3102 = vsel %vm3101, %v3100, %v3098
    %v3103 = vperm.slane %v2800, %v3041
    %v3104 = vperm.slane %v2801, %v3043
    %v3105 = vsel %vm3045, %v3104, %v3103
    %v3106 = vperm.slane %v2802, %v3047
    %v3107 = vsel %vm3049, %v3106, %v3105
    %v3108 = vperm.slane %v2803, %v3051
    %v3109 = vsel %vm3053, %v3108, %v3107
    %v3110 = vperm.slane %v2804, %v3055
    %v3111 = vsel %vm3057, %v3110, %v3109
    %v3112 = vperm.slane %v2805, %v3059
    %v3113 = vsel %vm3061, %v3112, %v3111
    %v3114 = vperm.slane %v2806, %v3063
    %v3115 = vsel %vm3065, %v3114, %v3113
    %v3116 = vperm.slane %v2807, %v3067
    %v3117 = vsel %vm3069, %v3116, %v3115
    %v3118 = vperm.slane %v2808, %v3071
    %v3119 = vsel %vm3073, %v3118, %v3117
    %v3120 = vperm.slane %v2809, %v3075
    %v3121 = vsel %vm3077, %v3120, %v3119
    %v3122 = vperm.slane %v2810, %v3079
    %v3123 = vsel %vm3081, %v3122, %v3121
    %v3124 = vperm.slane %v2811, %v3083
    %v3125 = vsel %vm3085, %v3124, %v3123
    %v3126 = vperm.slane %v2812, %v3087
    %v3127 = vsel %vm3089, %v3126, %v3125
    %v3128 = vperm.slane %v2813, %v3091
    %v3129 = vsel %vm3093, %v3128, %v3127
    %v3130 = vperm.slane %v2814, %v3095
    %v3131 = vsel %vm3097, %v3130, %v3129
    %v3132 = vperm.slane %v2815, %v3099
    %v3133 = vsel %vm3101, %v3132, %v3131
    %v3134 = vperm.slane %v2816, %v3041
    %v3135 = vperm.slane %v2817, %v3043
    %v3136 = vsel %vm3045, %v3135, %v3134
    %v3137 = vperm.slane %v2818, %v3047
    %v3138 = vsel %vm3049, %v3137, %v3136
    %v3139 = vperm.slane %v2819, %v3051
    %v3140 = vsel %vm3053, %v3139, %v3138
    %v3141 = vperm.slane %v2820, %v3055
    %v3142 = vsel %vm3057, %v3141, %v3140
    %v3143 = vperm.slane %v2821, %v3059
    %v3144 = vsel %vm3061, %v3143, %v3142
    %v3145 = vperm.slane %v2822, %v3063
    %v3146 = vsel %vm3065, %v3145, %v3144
    %v3147 = vperm.slane %v2823, %v3067
    %v3148 = vsel %vm3069, %v3147, %v3146
    %v3149 = vperm.slane %v2824, %v3071
    %v3150 = vsel %vm3073, %v3149, %v3148
    %v3151 = vperm.slane %v2825, %v3075
    %v3152 = vsel %vm3077, %v3151, %v3150
    %v3153 = vperm.slane %v2826, %v3079
    %v3154 = vsel %vm3081, %v3153, %v3152
    %v3155 = vperm.slane %v2827, %v3083
    %v3156 = vsel %vm3085, %v3155, %v3154
    %v3157 = vperm.slane %v2828, %v3087
    %v3158 = vsel %vm3089, %v3157, %v3156
    %v3159 = vperm.slane %v2829, %v3091
    %v3160 = vsel %vm3093, %v3159, %v3158
    %v3161 = vperm.slane %v2830, %v3095
    %v3162 = vsel %vm3097, %v3161, %v3160
    %v3163 = vperm.slane %v2831, %v3099
    %v3164 = vsel %vm3101, %v3163, %v3162
    %v3165 = vperm.slane %v2832, %v3041
    %v3166 = vperm.slane %v2833, %v3043
    %v3167 = vsel %vm3045, %v3166, %v3165
    %v3168 = vperm.slane %v2834, %v3047
    %v3169 = vsel %vm3049, %v3168, %v3167
    %v3170 = vperm.slane %v2835, %v3051
    %v3171 = vsel %vm3053, %v3170, %v3169
    %v3172 = vperm.slane %v2836, %v3055
    %v3173 = vsel %vm3057, %v3172, %v3171
    %v3174 = vperm.slane %v2837, %v3059
    %v3175 = vsel %vm3061, %v3174, %v3173
    %v3176 = vperm.slane %v2838, %v3063
    %v3177 = vsel %vm3065, %v3176, %v3175
    %v3178 = vperm.slane %v2839, %v3067
    %v3179 = vsel %vm3069, %v3178, %v3177
    %v3180 = vperm.slane %v2840, %v3071
    %v3181 = vsel %vm3073, %v3180, %v3179
    %v3182 = vperm.slane %v2841, %v3075
    %v3183 = vsel %vm3077, %v3182, %v3181
    %v3184 = vperm.slane %v2842, %v3079
    %v3185 = vsel %vm3081, %v3184, %v3183
    %v3186 = vperm.slane %v2843, %v3083
    %v3187 = vsel %vm3085, %v3186, %v3185
    %v3188 = vperm.slane %v2844, %v3087
    %v3189 = vsel %vm3089, %v3188, %v3187
    %v3190 = vperm.slane %v2845, %v3091
    %v3191 = vsel %vm3093, %v3190, %v3189
    %v3192 = vperm.slane %v2846, %v3095
    %v3193 = vsel %vm3097, %v3192, %v3191
    %v3194 = vperm.slane %v2847, %v3099
    %v3195 = vsel %vm3101, %v3194, %v3193
    %v3196 = vperm.slane %v2848, %v3041
    %v3197 = vperm.slane %v2849, %v3043
    %v3198 = vsel %vm3045, %v3197, %v3196
    %v3199 = vperm.slane %v2850, %v3047
    %v3200 = vsel %vm3049, %v3199, %v3198
    %v3201 = vperm.slane %v2851, %v3051
    %v3202 = vsel %vm3053, %v3201, %v3200
    %v3203 = vperm.slane %v2852, %v3055
    %v3204 = vsel %vm3057, %v3203, %v3202
    %v3205 = vperm.slane %v2853, %v3059
    %v3206 = vsel %vm3061, %v3205, %v3204
    %v3207 = vperm.slane %v2854, %v3063
    %v3208 = vsel %vm3065, %v3207, %v3206
    %v3209 = vperm.slane %v2855, %v3067
    %v3210 = vsel %vm3069, %v3209, %v3208
    %v3211 = vperm.slane %v2856, %v3071
    %v3212 = vsel %vm3073, %v3211, %v3210
    %v3213 = vperm.slane %v2857, %v3075
    %v3214 = vsel %vm3077, %v3213, %v3212
    %v3215 = vperm.slane %v2858, %v3079
    %v3216 = vsel %vm3081, %v3215, %v3214
    %v3217 = vperm.slane %v2859, %v3083
    %v3218 = vsel %vm3085, %v3217, %v3216
    %v3219 = vperm.slane %v2860, %v3087
    %v3220 = vsel %vm3089, %v3219, %v3218
    %v3221 = vperm.slane %v2861, %v3091
    %v3222 = vsel %vm3093, %v3221, %v3220
    %v3223 = vperm.slane %v2862, %v3095
    %v3224 = vsel %vm3097, %v3223, %v3222
    %v3225 = vperm.slane %v2863, %v3099
    %v3226 = vsel %vm3101, %v3225, %v3224
    %v3227 = vperm.slane %v2864, %v3041
    %v3228 = vperm.slane %v2865, %v3043
    %v3229 = vsel %vm3045, %v3228, %v3227
    %v3230 = vperm.slane %v2866, %v3047
    %v3231 = vsel %vm3049, %v3230, %v3229
    %v3232 = vperm.slane %v2867, %v3051
    %v3233 = vsel %vm3053, %v3232, %v3231
    %v3234 = vperm.slane %v2868, %v3055
    %v3235 = vsel %vm3057, %v3234, %v3233
    %v3236 = vperm.slane %v2869, %v3059
    %v3237 = vsel %vm3061, %v3236, %v3235
    %v3238 = vperm.slane %v2870, %v3063
    %v3239 = vsel %vm3065, %v3238, %v3237
    %v3240 = vperm.slane %v2871, %v3067
    %v3241 = vsel %vm3069, %v3240, %v3239
    %v3242 = vperm.slane %v2872, %v3071
    %v3243 = vsel %vm3073, %v3242, %v3241
    %v3244 = vperm.slane %v2873, %v3075
    %v3245 = vsel %vm3077, %v3244, %v3243
    %v3246 = vperm.slane %v2874, %v3079
    %v3247 = vsel %vm3081, %v3246, %v3245
    %v3248 = vperm.slane %v2875, %v3083
    %v3249 = vsel %vm3085, %v3248, %v3247
    %v3250 = vperm.slane %v2876, %v3087
    %v3251 = vsel %vm3089, %v3250, %v3249
    %v3252 = vperm.slane %v2877, %v3091
    %v3253 = vsel %vm3093, %v3252, %v3251
    %v3254 = vperm.slane %v2878, %v3095
    %v3255 = vsel %vm3097, %v3254, %v3253
    %v3256 = vperm.slane %v2879, %v3099
    %v3257 = vsel %vm3101, %v3256, %v3255
    %v3258 = vperm.slane %v2880, %v3041
    %v3259 = vperm.slane %v2881, %v3043
    %v3260 = vsel %vm3045, %v3259, %v3258
    %v3261 = vperm.slane %v2882, %v3047
    %v3262 = vsel %vm3049, %v3261, %v3260
    %v3263 = vperm.slane %v2883, %v3051
    %v3264 = vsel %vm3053, %v3263, %v3262
    %v3265 = vperm.slane %v2884, %v3055
    %v3266 = vsel %vm3057, %v3265, %v3264
    %v3267 = vperm.slane %v2885, %v3059
    %v3268 = vsel %vm3061, %v3267, %v3266
    %v3269 = vperm.slane %v2886, %v3063
    %v3270 = vsel %vm3065, %v3269, %v3268
    %v3271 = vperm.slane %v2887, %v3067
    %v3272 = vsel %vm3069, %v3271, %v3270
    %v3273 = vperm.slane %v2888, %v3071
    %v3274 = vsel %vm3073, %v3273, %v3272
    %v3275 = vperm.slane %v2889, %v3075
    %v3276 = vsel %vm3077, %v3275, %v3274
    %v3277 = vperm.slane %v2890, %v3079
    %v3278 = vsel %vm3081, %v3277, %v3276
    %v3279 = vperm.slane %v2891, %v3083
    %v3280 = vsel %vm3085, %v3279, %v3278
    %v3281 = vperm.slane %v2892, %v3087
    %v3282 = vsel %vm3089, %v3281, %v3280
    %v3283 = vperm.slane %v2893, %v3091
    %v3284 = vsel %vm3093, %v3283, %v3282
    %v3285 = vperm.slane %v2894, %v3095
    %v3286 = vsel %vm3097, %v3285, %v3284
    %v3287 = vperm.slane %v2895, %v3099
    %v3288 = vsel %vm3101, %v3287, %v3286
    %v3289 = vperm.slane %v2896, %v3041
    %v3290 = vperm.slane %v2897, %v3043
    %v3291 = vsel %vm3045, %v3290, %v3289
    %v3292 = vperm.slane %v2898, %v3047
    %v3293 = vsel %vm3049, %v3292, %v3291
    %v3294 = vperm.slane %v2899, %v3051
    %v3295 = vsel %vm3053, %v3294, %v3293
    %v3296 = vperm.slane %v2900, %v3055
    %v3297 = vsel %vm3057, %v3296, %v3295
    %v3298 = vperm.slane %v2901, %v3059
    %v3299 = vsel %vm3061, %v3298, %v3297
    %v3300 = vperm.slane %v2902, %v3063
    %v3301 = vsel %vm3065, %v3300, %v3299
    %v3302 = vperm.slane %v2903, %v3067
    %v3303 = vsel %vm3069, %v3302, %v3301
    %v3304 = vperm.slane %v2904, %v3071
    %v3305 = vsel %vm3073, %v3304, %v3303
    %v3306 = vperm.slane %v2905, %v3075
    %v3307 = vsel %vm3077, %v3306, %v3305
    %v3308 = vperm.slane %v2906, %v3079
    %v3309 = vsel %vm3081, %v3308, %v3307
    %v3310 = vperm.slane %v2907, %v3083
    %v3311 = vsel %vm3085, %v3310, %v3309
    %v3312 = vperm.slane %v2908, %v3087
    %v3313 = vsel %vm3089, %v3312, %v3311
    %v3314 = vperm.slane %v2909, %v3091
    %v3315 = vsel %vm3093, %v3314, %v3313
    %v3316 = vperm.slane %v2910, %v3095
    %v3317 = vsel %vm3097, %v3316, %v3315
    %v3318 = vperm.slane %v2911, %v3099
    %v3319 = vsel %vm3101, %v3318, %v3317
    %vm3320 = vcmask 1041409
    %v3321 = vsel %vm3320, %v3133, %v3102
    %vm3322 = vcmask 1042434
    %v3323 = vsel %vm3322, %v3164, %v3321
    %vm3324 = vcmask 1043459
    %v3325 = vsel %vm3324, %v3195, %v3323
    %vm3326 = vcmask 1044484
    %v3327 = vsel %vm3326, %v3226, %v3325
    %vm3328 = vcmask 1045509
    %v3329 = vsel %vm3328, %v3257, %v3327
    %vm3330 = vcmask 1046534
    %v3331 = vsel %vm3330, %v3288, %v3329
    %vm3332 = vcmask 1047559
    %v3333 = vsel %vm3332, %v3319, %v3331
    %3335 = vst [vmem:[#allocation3] sm:$0xff] %v3333
    // Predicated region
    $region30: #{tpu_custom_call.1} parent=1 // pred_check
      _
    $region31: #{tpu_custom_call.1} parent=1 // pred_check_branch
      %3337 = sbr.rel (0) target = $region33
    $region32: #{tpu_custom_call.1} parent=1 // pred_region
      %3339 = vsyncadd [#allocation4], 0
      %s3341 = sshll.u32 [#allocation3], 4
      %s3342 = int_to_ptr.vmem [resolvable:$true] %s3341
      %s3343 = sshll.u32 %s7, 4
      %s3344 = int_to_ptr.hbm [resolvable:$true] %s3343
      %3346 = dma.vmem_to_hbm [thread:$0]  %s3342, 128, %s3344, [#allocation4]
    $region33: #{tpu_custom_call.1} parent=1 // pred_fallthru
      _
    // Predicated region
    $region34: #{tpu_custom_call.1} parent=1 // pred_check
      _
    $region35: #{tpu_custom_call.1} parent=1 // pred_check_branch
      %3348 = sbr.rel (0) target = $region37
    $region36: #{tpu_custom_call.1} parent=1 // pred_region
      %3350 = dma.done [#allocation4], 128
    $region37: #{tpu_custom_call.1} parent=1 // pred_fallthru
      _
    %3351 = vsyncpa [#allocation4], 1

</llo_original>
